<compile_context>
chip_gen: v7x
topology: tpu7x:2x2x1
jax: 0.10.0
libtpu: 0.0.40
codegen_flags: <defaults>
</compile_context>

<pallas_src>
import functools

import jax
import jax.numpy as jnp
from jax.experimental import pallas as pl
from jax.experimental.pallas import tpu as pltpu

SCALING_FACTOR = 0.18215  # _vae.config.scaling_factor in SD VAEs
VMEM_LIMIT = 48 * 1024 * 1024  # > 16/32 MiB scoped defaults, < v7x 64 MiB physical


def _cparams(sem):
    return pltpu.CompilerParams(dimension_semantics=sem,
                                vmem_limit_bytes=VMEM_LIMIT)


def _to_hwc(x_chw):
    """(C, H, W) -> (H, W, C) via reshape + 2-D XLU transpose (in VMEM)."""
    C, H, W = x_chw.shape
    return jnp.transpose(x_chw.reshape(C, H * W)).reshape(H, W, C)


# ----------------------------------------------------------------------------
# Kernel 1: skip fusion — h1 + unpatchify(h2), NCHW in / NHWC bf16 out.
# grid = (B, P): one row of patches per step; patch placement is done by the
# output BlockSpec index_map (no in-kernel P*P concatenate tree, no XLA
# transpose of the fused skip afterwards).
# ----------------------------------------------------------------------------
def _fuse_skip_kernel(h1_ref, h2_ref, o_ref, *, P, hp, wp, c):
    py = pl.program_id(1)
    row_start = pl.multiple_of(py * hp, hp)
    row1 = h1_ref[0, :, pl.ds(row_start, hp), :]                  # (c, hp, w) f32
    for px in range(P):
        patch = row1[:, :, px * wp:(px + 1) * wp] + h2_ref[px]    # (c, hp, wp)
        o_ref[0:1, :, px * wp:(px + 1) * wp, :] = (
            _to_hwc(patch)[None].astype(o_ref.dtype))


def fuse_skip(h1, h2, patch_num):
    """h1: (B, c, h, w) f32; h2: (B*P*P, c, h/P, w/P) f32 -> (B, h, w, c) bf16."""
    B, c, h, w = h1.shape
    P = patch_num
    hp, wp = h // P, w // P
    assert h2.shape == (B * P * P, c, hp, wp)
    kern = functools.partial(_fuse_skip_kernel, P=P, hp=hp, wp=wp, c=c)
    return pl.pallas_call(
        kern,
        out_shape=jax.ShapeDtypeStruct((B, h, w, c), jnp.bfloat16),
        grid=(B, P),
        in_specs=[
            # full-view activation: fetched once per batch, row-sliced in-kernel
            pl.BlockSpec((1, c, h, w), lambda b, py: (b, 0, 0, 0)),
            # one contiguous row of P patches of the patch encoder
            pl.BlockSpec((P, c, hp, wp), lambda b, py: (b * P + py, 0, 0, 0)),
        ],
        out_specs=pl.BlockSpec((1, hp, w, c), lambda b, py: (b, py, 0, 0)),
        compiler_params=_cparams(("parallel", "parallel")),
    )(h1, h2)


# ----------------------------------------------------------------------------
# Kernel 2: 3x3 "same" conv (+ optional fused skip channels, SiLU, clamp).
# Halo is built in a zero-bordered VMEM scratch; 9 per-tap matmuls accumulate
# in f32; output stored lane-dense ((B,H,W*Cout) or NCHW (B,Cout,H*W)).
# ----------------------------------------------------------------------------
def _conv3x3_kernel(*refs, H, W, Ch, Cs, Cout, act, clamp, nchw_in, nchw_out):
    if Cs > 0:
        h_ref, s_ref, w_ref, b_ref, o_ref, xp_ref = refs
    else:
        h_ref, w_ref, b_ref, o_ref, xp_ref = refs
        s_ref = None
    Ct = Ch + Cs

    h = h_ref[0]
    if nchw_in:
        h = _to_hwc(h)                                   # NCHW latent -> HWC
    h = h.astype(jnp.bfloat16)

    # 1-pixel zero halo: borders zeroed, interior written once.
    xp_ref[0:1, :, :] = jnp.zeros((1, W + 2, Ct), jnp.bfloat16)
    xp_ref[H + 1:H + 2, :, :] = jnp.zeros((1, W + 2, Ct), jnp.bfloat16)
    xp_ref[:, 0:1, :] = jnp.zeros((H + 2, 1, Ct), jnp.bfloat16)
    xp_ref[:, W + 1:W + 2, :] = jnp.zeros((H + 2, 1, Ct), jnp.bfloat16)
    xp_ref[1:H + 1, 1:W + 1, 0:Ch] = h
    if s_ref is not None:                                # fused skip channels
        xp_ref[1:H + 1, 1:W + 1, Ch:Ct] = s_ref[0].astype(jnp.bfloat16)

    # 9 per-tap MXU matmuls, f32 accumulation (no im2col materialization).
    acc = jnp.zeros((H * W, Cout), jnp.float32)
    t = 0
    for dy in range(3):
        for dx in range(3):
            tap = xp_ref[dy:dy + H, dx:dx + W, :].reshape(H * W, Ct)
            acc += jnp.dot(tap, w_ref[t], preferred_element_type=jnp.float32)
            t += 1
    acc = acc + b_ref[0, :]
    if act == "silu":
        acc = acc * jax.nn.sigmoid(acc)
    if clamp:
        acc = jnp.clip(acc, -1.0, 1.0)
    if nchw_out:
        # channel-major lane-dense store: H*W on the lane axis.
        o_ref[...] = jnp.transpose(acc)[None].astype(o_ref.dtype)
    else:
        # lane-dense NHWC slab: last dim W*Cout (multiple of 128 for Cout=32).
        o_ref[...] = acc.reshape(1, H, W * Cout).astype(o_ref.dtype)


def conv3x3(h, skip, w_taps, bias, *, act=None, clamp=False,
            nchw_in=False, nchw_out=False, out_dtype=jnp.bfloat16):
    """3x3 conv over concat([h, skip]) channels; w_taps: (9, Ch+Cs, Cout) bf16."""
    if nchw_in:
        B, Ch, H, W = h.shape
    else:
        B, H, W, Ch = h.shape
    Cs = 0 if skip is None else skip.shape[-1]
    Ct, Cout = Ch + Cs, w_taps.shape[-1]
    assert w_taps.shape == (9, Ct, Cout)
    if skip is not None:
        assert skip.shape == (B, H, W, Cs)

    kern = functools.partial(_conv3x3_kernel, H=H, W=W, Ch=Ch, Cs=Cs, Cout=Cout,
                             act=act, clamp=clamp, nchw_in=nchw_in,
                             nchw_out=nchw_out)
    h_block = (1, Ch, H, W) if nchw_in else (1, H, W, Ch)
    in_specs = [pl.BlockSpec(h_block, lambda b: (b, 0, 0, 0))]
    inputs = [h]
    if skip is not None:
        in_specs.append(pl.BlockSpec((1, H, W, Cs), lambda b: (b, 0, 0, 0)))
        inputs.append(skip)
    in_specs += [pl.BlockSpec((9, Ct, Cout), lambda b: (0, 0, 0)),
                 pl.BlockSpec((1, Cout), lambda b: (0, 0))]
    inputs += [w_taps, bias]

    if nchw_out:
        out_shape = jax.ShapeDtypeStruct((B, Cout, H * W), out_dtype)
        out_spec = pl.BlockSpec((1, Cout, H * W), lambda b: (b, 0, 0))
    else:
        out_shape = jax.ShapeDtypeStruct((B, H, W * Cout), out_dtype)
        out_spec = pl.BlockSpec((1, H, W * Cout), lambda b: (b, 0, 0))

    out = pl.pallas_call(
        kern, out_shape=out_shape, grid=(B,),
        in_specs=in_specs, out_specs=out_spec,
        scratch_shapes=[pltpu.VMEM((H + 2, W + 2, Ct), jnp.bfloat16)],
        compiler_params=_cparams(("parallel",)),
    )(*inputs)
    # free, contiguous reinterpretations — no extra HBM pass
    if nchw_out:
        return out.reshape(B, Cout, H, W)
    return out.reshape(B, H, W, Cout)


# ----------------------------------------------------------------------------
# Kernel 3: fused [nearest-2x upsample + skip inject + 3x3 conv + SiLU].
# The upsample is folded into 4 phase-specific 2x2 convs on the low-res tile
# (pre-summed weights); the skip part is a plain 3x3 conv at output resolution.
# ----------------------------------------------------------------------------
def _upconv3x3_kernel(h_ref, s_ref, wp_ref, ws_ref, b_ref, o_ref,
                      xlo_ref, xhi_ref, *, Hh, Wh, Ch, Cs, Cout):
    H, W = 2 * Hh, 2 * Wh

    # low-res padded tile of h (never materialized at 2x resolution)
    xlo_ref[0:1, :, :] = jnp.zeros((1, Wh + 2, Ch), jnp.bfloat16)
    xlo_ref[Hh + 1:Hh + 2, :, :] = jnp.zeros((1, Wh + 2, Ch), jnp.bfloat16)
    xlo_ref[:, 0:1, :] = jnp.zeros((Hh + 2, 1, Ch), jnp.bfloat16)
    xlo_ref[:, Wh + 1:Wh + 2, :] = jnp.zeros((Hh + 2, 1, Ch), jnp.bfloat16)
    xlo_ref[1:Hh + 1, 1:Wh + 1, :] = h_ref[0].astype(jnp.bfloat16)

    # high-res padded tile of the skip activations
    xhi_ref[0:1, :, :] = jnp.zeros((1, W + 2, Cs), jnp.bfloat16)
    xhi_ref[H + 1:H + 2, :, :] = jnp.zeros((1, W + 2, Cs), jnp.bfloat16)
    xhi_ref[:, 0:1, :] = jnp.zeros((H + 2, 1, Cs), jnp.bfloat16)
    xhi_ref[:, W + 1:W + 2, :] = jnp.zeros((H + 2, 1, Cs), jnp.bfloat16)
    xhi_ref[1:H + 1, 1:W + 1, :] = s_ref[0].astype(jnp.bfloat16)

    # skip contribution: plain 3x3 conv at the output resolution
    acc_s = jnp.zeros((H * W, Cout), jnp.float32)
    t = 0
    for dy in range(3):
        for dx in range(3):
            tap = xhi_ref[dy:dy + H, dx:dx + W, :].reshape(H * W, Cs)
            acc_s += jnp.dot(tap, ws_ref[t], preferred_element_type=jnp.float32)
            t += 1

    # h contribution: 4 output phases, 2x2 taps each on the low-res tile
    rows = []
    for ry in range(2):
        cols = []
        for rx in range(2):
            accp = jnp.zeros((Hh * Wh, Cout), jnp.float32)
            for ay in range(2):
                for ax in range(2):
                    tap = xlo_ref[ry + ay:ry + ay + Hh,
                                  rx + ax:rx + ax + Wh, :].reshape(Hh * Wh, Ch)
                    accp += jnp.dot(tap, wp_ref[ry * 8 + rx * 4 + ay * 2 + ax],
                                    preferred_element_type=jnp.float32)
            cols.append(accp.reshape(Hh, Wh, Cout)[:, :, None])
        # interleave the two column phases -> (Hh, W, Cout)
        rows.append(jnp.concatenate(cols, axis=2).reshape(Hh, W, Cout)[:, None])
    # interleave the two row phases -> (H, W, Cout)
    up = jnp.concatenate(rows, axis=1).reshape(H, W, Cout)

    y = up + acc_s.reshape(H, W, Cout) + b_ref[0, :]
    y = y * jax.nn.sigmoid(y)                                     # SiLU in f32
    o_ref[...] = y.reshape(1, H, W * Cout).astype(o_ref.dtype)


def upconv3x3(h, skip, w_phase, w_skip, bias):
    """conv3x3(concat([nearest_up2x(h), skip])) + SiLU, upsample folded away."""
    B, Hh, Wh, Ch = h.shape
    H, W = 2 * Hh, 2 * Wh
    Cs, Cout = skip.shape[-1], w_skip.shape[-1]
    assert skip.shape == (B, H, W, Cs)
    assert w_phase.shape == (16, Ch, Cout)
    assert w_skip.shape == (9, Cs, Cout)

    kern = functools.partial(_upconv3x3_kernel, Hh=Hh, Wh=Wh, Ch=Ch, Cs=Cs,
                             Cout=Cout)
    out = pl.pallas_call(
        kern,
        out_shape=jax.ShapeDtypeStruct((B, H, W * Cout), jnp.bfloat16),
        grid=(B,),
        in_specs=[
            pl.BlockSpec((1, Hh, Wh, Ch), lambda b: (b, 0, 0, 0)),
            pl.BlockSpec((1, H, W, Cs), lambda b: (b, 0, 0, 0)),
            pl.BlockSpec((16, Ch, Cout), lambda b: (0, 0, 0)),
            pl.BlockSpec((9, Cs, Cout), lambda b: (0, 0, 0)),
            pl.BlockSpec((1, Cout), lambda b: (0, 0)),
        ],
        out_specs=pl.BlockSpec((1, H, W * Cout), lambda b: (b, 0, 0)),
        scratch_shapes=[pltpu.VMEM((Hh + 2, Wh + 2, Ch), jnp.bfloat16),
                        pltpu.VMEM((H + 2, W + 2, Cs), jnp.bfloat16)],
        compiler_params=_cparams(("parallel",)),
    )(h, skip, w_phase, w_skip, bias)
    return out.reshape(B, H, W, Cout)   # free reinterpretation


# ----------------------------------------------------------------------------
# Host-side weight preparation (synthetic stand-in for the VAE decoder weights)
# ----------------------------------------------------------------------------
def _fold_up2x_weight(w):
    """(3,3,Cin,Cout) -> (16,Cin,Cout): nearest-2x upsample folded into phases."""
    rows = {0: jnp.stack([w[0], w[1] + w[2]], axis=0),
            1: jnp.stack([w[0] + w[1], w[2]], axis=0)}
    taps = []
    for ry in range(2):
        wr = rows[ry]
        cols = {0: jnp.stack([wr[:, 0], wr[:, 1] + wr[:, 2]], axis=1),
                1: jnp.stack([wr[:, 0] + wr[:, 1], wr[:, 2]], axis=1)}
        for rx in range(2):
            wc = cols[rx]                                   # (2,2,Cin,Cout)
            for ay in range(2):
                for ax in range(2):
                    taps.append(wc[ay, ax])
    return jnp.stack(taps, axis=0).astype(jnp.bfloat16)     # (16, Cin, Cout)


def _init_decoder_params(key, skip_chs, hid, latent_c=4, out_c=3, gamma=1.0):
    def nrm(k, shape, s=0.05):
        return s * jax.random.normal(k, shape, jnp.float32)

    def taps9(w):   # (3,3,Cin,Cout) -> (9,Cin,Cout) bf16, tap-major (dy*3+dx)
        return w.reshape(9, w.shape[2], w.shape[3]).astype(jnp.bfloat16)

    ks = jax.random.split(key, 16)
    conv_in_w = nrm(ks[0], (3, 3, latent_c, hid)) / SCALING_FACTOR  # scale folded
    skip_w = [nrm(ks[1 + i], (skip_chs[i], hid)) for i in range(4)]
    stage_w = [nrm(ks[5 + i], (3, 3, hid, hid)) for i in range(4)]
    conv_out_w = nrm(ks[9], (3, 3, hid, out_c))

    # 1x1 skip projection folded into the stage 3x3 conv (exact, conv is linear)
    w_skip3 = [gamma * jnp.einsum("sc,yxco->yxso", skip_w[i], stage_w[i])
               for i in range(4)]

    return {
        "w_in": taps9(conv_in_w),
        "b_in": jnp.zeros((1, hid), jnp.float32),
        # deepest stage (index 3): no upsample -> single channel-fused weight
        "w_stage3": taps9(jnp.concatenate([stage_w[3], w_skip3[3]], axis=2)),
        # upsampling stages: phase-folded main weight + separate skip weight
        "w_up": {i: _fold_up2x_weight(stage_w[i]) for i in (0, 1, 2)},
        "w_sk": {i: taps9(w_skip3[i]) for i in (0, 1, 2)},
        "b_stage": [jnp.zeros((1, hid), jnp.float32) for _ in range(4)],
        "w_out": taps9(conv_out_w),
        "b_out": jnp.zeros((1, out_c), jnp.float32),
    }


class VAEDecodeMultiview:
    """Pallas port of VAE_decode_multiview (holds both a2b and b2a decoders)."""

    def __init__(self, key, skip_chs=(16, 32, 32, 32), hid=32):
        k1, k2 = jax.random.split(key)
        self.skip_chs = skip_chs
        self.hid = hid
        self.params = {
            "a2b": _init_decoder_params(k1, skip_chs, hid),
            "b2a": _init_decoder_params(k2, skip_chs, hid),
        }

    def __call__(self, x, down_blocks, down_blocks_patch,
                 direction="a2b", patch_num=4):
        # x: (B, 4, S/8, S/8) latents, NCHW
        # down_blocks[i]:       (B, C_i, S/2^i, S/2^i)        (full-view encoder)
        # down_blocks_patch[i]: (B*P*P, C_i, S/(2^i P), ...)  (patch encoder)
        assert direction in ("a2b", "b2a")
        p = self.params[direction]

        # --- 1. skip fusion: un-patchify + add, NHWC bf16 written in-kernel ---
        skip = [fuse_skip(h1, h2, patch_num)
                for h1, h2 in zip(down_blocks, down_blocks_patch)]

        # --- 2. decode(x / scaling_factor): scale folded into w_in; the NCHW
        #         latent is consumed directly by the kernel (tiny tensor) ------
        h = conv3x3(x, None, p["w_in"], p["b_in"], nchw_in=True)
        # deepest-resolution skip first, same resolution as the latent
        h = conv3x3(h, skip[3], p["w_stage3"], p["b_stage"][3], act="silu")
        # upsampling stages: nearest-2x folded into the phase weights
        for si in (2, 1, 0):
            h = upconv3x3(h, skip[si], p["w_up"][si], p["w_sk"][si],
                          p["b_stage"][si])

        # --- 3. conv_out + clamp(-1, 1), NCHW f32 stored lane-dense in-kernel -
        return conv3x3(h, None, p["w_out"], p["b_out"], clamp=True,
                       nchw_out=True, out_dtype=jnp.float32)


if __name__ == "__main__":
    key = jax.random.PRNGKey(0)
    B, P, S = 2, 4, 32            # batch, patch_num, image size
    lat = S // 8                  # latent spatial size
    skip_chs = (16, 32, 32, 32)   # encoder down-block channels (hi-res first)

    kx, *kd = jax.random.split(key, 10)
    x = jax.random.normal(kx, (B, 4, lat, lat), jnp.float32)

    down_blocks, down_blocks_patch = [], []
    res = S
    for i, c in enumerate(skip_chs):
        k1, k2 = jax.random.split(kd[i])
        down_blocks.append(jax.random.normal(k1, (B, c, res, res), jnp.float32))
        down_blocks_patch.append(
            jax.random.normal(k2, (B * P * P, c, res // P, res // P),
                              jnp.float32))
        res //= 2

    model = VAEDecodeMultiview(jax.random.PRNGKey(42), skip_chs=skip_chs, hid=32)
    out = model(x, down_blocks, down_blocks_patch, direction="a2b", patch_num=P)
    out = jax.block_until_ready(out)

    assert out.shape == (B, 3, S, S), out.shape
    assert bool(jnp.all(out >= -1.0)) and bool(jnp.all(out <= 1.0))
    print("KERNEL_OK")
</pallas_src>

<mosaic_0001>
module attributes {stable_mosaic.version = 11 : i64} {
  func.func @_fuse_skip_kernel(%arg0: i32, %arg1: i32, %arg2: memref<1x16x32x32xf32, #tpu.memory_space<vmem>>, %arg3: memref<4x16x8x8xf32, #tpu.memory_space<vmem>>, %arg4: memref<1x8x32x16xbf16, #tpu.memory_space<vmem>>) attributes {dimension_semantics = [#tpu.dimension_semantics<parallel>, #tpu.dimension_semantics<parallel>], iteration_bounds = array<i64: 2, 4>, scalar_prefetch = 0 : i64, scratch_operands = 0 : i64, tpu.core_type = #tpu.core_type<tc>, window_params = [{transform_indices = @transform_0, window_bounds = array<i64: 1, 16, 32, 32>}, {transform_indices = @transform_1, window_bounds = array<i64: 4, 16, 8, 8>}, {transform_indices = @transform_2, window_bounds = array<i64: 1, 8, 32, 16>}]} {
    %c8_i32 = arith.constant 8 : i32
    %0 = arith.muli %arg1, %c8_i32 : i32
    %1 = tpu.assume_multiple %0, 8 : i32
    %c0 = arith.constant 0 : index
    %c0_0 = arith.constant 0 : index
    %2 = arith.index_cast %1 : i32 to index
    %c0_1 = arith.constant 0 : index
    %3 = vector.load %arg2[%c0, %c0_0, %2, %c0_1] : memref<1x16x32x32xf32, #tpu.memory_space<vmem>>, vector<1x16x8x32xf32>
    %4 = vector.shape_cast %3 : vector<1x16x8x32xf32> to vector<16x8x32xf32>
    %5 = vector.extract_strided_slice %4 {offsets = [0, 0, 0], sizes = [16, 8, 8], strides = [1, 1, 1]} : vector<16x8x32xf32> to vector<16x8x8xf32>
    %c0_2 = arith.constant 0 : index
    %c0_3 = arith.constant 0 : index
    %c0_4 = arith.constant 0 : index
    %c0_5 = arith.constant 0 : index
    %6 = vector.load %arg3[%c0_2, %c0_3, %c0_4, %c0_5] : memref<4x16x8x8xf32, #tpu.memory_space<vmem>>, vector<1x16x8x8xf32>
    %7 = vector.shape_cast %6 : vector<1x16x8x8xf32> to vector<16x8x8xf32>
    %8 = arith.addf %5, %7 : vector<16x8x8xf32>
    %9 = vector.shape_cast %8 : vector<16x8x8xf32> to vector<16x64xf32>
    %10 = tpu.transpose %9, [1, 0] : vector<16x64xf32> -> vector<64x16xf32>
    %11 = vector.shape_cast %10 : vector<64x16xf32> to vector<8x8x16xf32>
    %12 = vector.shape_cast %11 : vector<8x8x16xf32> to vector<1x8x8x16xf32>
    %13 = arith.truncf %12 : vector<1x8x8x16xf32> to vector<1x8x8x16xbf16>
    %c0_6 = arith.constant 0 : index
    %c0_7 = arith.constant 0 : index
    %c0_8 = arith.constant 0 : index
    %c0_9 = arith.constant 0 : index
    %14 = vector.load %arg4[%c0_6, %c0_7, %c0_8, %c0_9] : memref<1x8x32x16xbf16, #tpu.memory_space<vmem>>, vector<1x8x8x16xbf16>
    tpu.vector_store %arg4[%c0_6, %c0_7, %c0_8, %c0_9], %13 {strides = array<i32>} : memref<1x8x32x16xbf16, #tpu.memory_space<vmem>>, vector<1x8x8x16xbf16>,
    %15 = vector.extract_strided_slice %4 {offsets = [0, 0, 8], sizes = [16, 8, 8], strides = [1, 1, 1]} : vector<16x8x32xf32> to vector<16x8x8xf32>
    %c1 = arith.constant 1 : index
    %c0_10 = arith.constant 0 : index
    %c0_11 = arith.constant 0 : index
    %c0_12 = arith.constant 0 : index
    %16 = vector.load %arg3[%c1, %c0_10, %c0_11, %c0_12] : memref<4x16x8x8xf32, #tpu.memory_space<vmem>>, vector<1x16x8x8xf32>
    %17 = vector.shape_cast %16 : vector<1x16x8x8xf32> to vector<16x8x8xf32>
    %18 = arith.addf %15, %17 : vector<16x8x8xf32>
    %19 = vector.shape_cast %18 : vector<16x8x8xf32> to vector<16x64xf32>
    %20 = tpu.transpose %19, [1, 0] : vector<16x64xf32> -> vector<64x16xf32>
    %21 = vector.shape_cast %20 : vector<64x16xf32> to vector<8x8x16xf32>
    %22 = vector.shape_cast %21 : vector<8x8x16xf32> to vector<1x8x8x16xf32>
    %23 = arith.truncf %22 : vector<1x8x8x16xf32> to vector<1x8x8x16xbf16>
    %c0_13 = arith.constant 0 : index
    %c0_14 = arith.constant 0 : index
    %c8 = arith.constant 8 : index
    %c0_15 = arith.constant 0 : index
    %24 = vector.load %arg4[%c0_13, %c0_14, %c8, %c0_15] : memref<1x8x32x16xbf16, #tpu.memory_space<vmem>>, vector<1x8x8x16xbf16>
    tpu.vector_store %arg4[%c0_13, %c0_14, %c8, %c0_15], %23 {strides = array<i32>} : memref<1x8x32x16xbf16, #tpu.memory_space<vmem>>, vector<1x8x8x16xbf16>,
    %25 = vector.extract_strided_slice %4 {offsets = [0, 0, 16], sizes = [16, 8, 8], strides = [1, 1, 1]} : vector<16x8x32xf32> to vector<16x8x8xf32>
    %c2 = arith.constant 2 : index
    %c0_16 = arith.constant 0 : index
    %c0_17 = arith.constant 0 : index
    %c0_18 = arith.constant 0 : index
    %26 = vector.load %arg3[%c2, %c0_16, %c0_17, %c0_18] : memref<4x16x8x8xf32, #tpu.memory_space<vmem>>, vector<1x16x8x8xf32>
    %27 = vector.shape_cast %26 : vector<1x16x8x8xf32> to vector<16x8x8xf32>
    %28 = arith.addf %25, %27 : vector<16x8x8xf32>
    %29 = vector.shape_cast %28 : vector<16x8x8xf32> to vector<16x64xf32>
    %30 = tpu.transpose %29, [1, 0] : vector<16x64xf32> -> vector<64x16xf32>
    %31 = vector.shape_cast %30 : vector<64x16xf32> to vector<8x8x16xf32>
    %32 = vector.shape_cast %31 : vector<8x8x16xf32> to vector<1x8x8x16xf32>
    %33 = arith.truncf %32 : vector<1x8x8x16xf32> to vector<1x8x8x16xbf16>
    %c0_19 = arith.constant 0 : index
    %c0_20 = arith.constant 0 : index
    %c16 = arith.constant 16 : index
    %c0_21 = arith.constant 0 : index
    %34 = vector.load %arg4[%c0_19, %c0_20, %c16, %c0_21] : memref<1x8x32x16xbf16, #tpu.memory_space<vmem>>, vector<1x8x8x16xbf16>
    tpu.vector_store %arg4[%c0_19, %c0_20, %c16, %c0_21], %33 {strides = array<i32>} : memref<1x8x32x16xbf16, #tpu.memory_space<vmem>>, vector<1x8x8x16xbf16>,
    %35 = vector.extract_strided_slice %4 {offsets = [0, 0, 24], sizes = [16, 8, 8], strides = [1, 1, 1]} : vector<16x8x32xf32> to vector<16x8x8xf32>
    %c3 = arith.constant 3 : index
    %c0_22 = arith.constant 0 : index
    %c0_23 = arith.constant 0 : index
    %c0_24 = arith.constant 0 : index
    %36 = vector.load %arg3[%c3, %c0_22, %c0_23, %c0_24] : memref<4x16x8x8xf32, #tpu.memory_space<vmem>>, vector<1x16x8x8xf32>
    %37 = vector.shape_cast %36 : vector<1x16x8x8xf32> to vector<16x8x8xf32>
    %38 = arith.addf %35, %37 : vector<16x8x8xf32>
    %39 = vector.shape_cast %38 : vector<16x8x8xf32> to vector<16x64xf32>
    %40 = tpu.transpose %39, [1, 0] : vector<16x64xf32> -> vector<64x16xf32>
    %41 = vector.shape_cast %40 : vector<64x16xf32> to vector<8x8x16xf32>
    %42 = vector.shape_cast %41 : vector<8x8x16xf32> to vector<1x8x8x16xf32>
    %43 = arith.truncf %42 : vector<1x8x8x16xf32> to vector<1x8x8x16xbf16>
    %c0_25 = arith.constant 0 : index
    %c0_26 = arith.constant 0 : index
    %c24 = arith.constant 24 : index
    %c0_27 = arith.constant 0 : index
    %44 = vector.load %arg4[%c0_25, %c0_26, %c24, %c0_27] : memref<1x8x32x16xbf16, #tpu.memory_space<vmem>>, vector<1x8x8x16xbf16>
    tpu.vector_store %arg4[%c0_25, %c0_26, %c24, %c0_27], %43 {strides = array<i32>} : memref<1x8x32x16xbf16, #tpu.memory_space<vmem>>, vector<1x8x8x16xbf16>,
    return
  }
  func.func @transform_0(%arg0: i32, %arg1: i32) -> (i32, i32, i32, i32) {
    %c0_i32 = arith.constant 0 : i32
    %c0_i32_0 = arith.constant 0 : i32
    %c0_i32_1 = arith.constant 0 : i32
    %c0_i32_2 = arith.constant 0 : i32
    return %arg0, %c0_i32, %c0_i32_0, %c0_i32_1 : i32, i32, i32, i32
  }
  func.func @transform_1(%arg0: i32, %arg1: i32) -> (i32, i32, i32, i32) {
    %c4_i32 = arith.constant 4 : i32
    %0 = arith.muli %arg0, %c4_i32 : i32
    %1 = arith.addi %0, %arg1 : i32
    %c0_i32 = arith.constant 0 : i32
    %c0_i32_0 = arith.constant 0 : i32
    %c0_i32_1 = arith.constant 0 : i32
    %c0_i32_2 = arith.constant 0 : i32
    return %1, %c0_i32, %c0_i32_0, %c0_i32_1 : i32, i32, i32, i32
  }
  func.func @transform_2(%arg0: i32, %arg1: i32) -> (i32, i32, i32, i32) {
    %c0_i32 = arith.constant 0 : i32
    %c0_i32_0 = arith.constant 0 : i32
    %c0_i32_1 = arith.constant 0 : i32
    return %arg0, %arg1, %c0_i32, %c0_i32_0 : i32, i32, i32, i32
  }
}

</mosaic_0001>

<llo_original>
// kernel: tpu_custom_call.1
$region0: #{tpu_custom_call.1}
  #allocation0 [shape = 'u32[]', space=smem, size = 0x4, offset = 0x4, fixed_abs, tag = 'smem constant byte address 0x4 - core index']
  #allocation1 [shape = 'u32[144,128]{1,0:T(1,128)}', space=vmem, size = 0x12000, scoped, tag = 'internal scratch']
  %s0 = inlined_call_operand.vmem [shape: f32[2,16,32,32], index: 0, kind: input, shape index: {}]
  %s1 = inlined_call_operand.vmem [shape: f32[32,16,8,8], index: 1, kind: input, shape index: {}]
  %s2 = inlined_call_operand.vmem [shape: bf16[2,32,32,16], index: 2, kind: output, shape index: {}]
  %s3 = sld [smem:[#allocation0]]
  $region41: #{tpu_custom_call.1} parent=0
    _
  %s5 = ssub.s32 1, %s3
  %s6 = scalar_select 0, %s5, %s3
  loop: start=0, step=1, limit=10
  $region2: #{tpu_custom_call.1} parent=0 // loop_pre_header
    _
  $region3: #{tpu_custom_call.1} parent=0 // loop_header
    %s8 = sphi 0, %s12
    %p9 = scmp.ge.s32.totalorder %s8, 10
    %s15 = sphi 0, %s27
    %s16 = sphi 0, %s23
    %s17 = sphi 0, %s15
    %s18 = sphi 0, %s16
    %s19 = sphi 0, %s17
    %s20 = sphi 0, %s18
    %s30 = sphi 0, %s32
    %s33 = sphi 0, %s30
    %s34 = sphi 0, %s33
    %s50 = sphi 0, %s34
    %s60 = sphi 0, %s62
    %s63 = sphi 0, %s60
    %s64 = sphi 0, %s63
    %s80 = sphi 0, %s64
    %s88 = sphi 0, %s90
    %s91 = sphi 0, %s88
    %s92 = sphi 0, %s91
    %s108 = sphi 0, %s92
  $region4: #{tpu_custom_call.1} parent=0 // loop_header_branch
    %11 = sbr.rel (%p9) target = $region8
  $region5: #{tpu_custom_call.1} parent=0 // loop_body
    %s13 = ssub.s32 %s8, 1
    %s14 = ssub.s32 %s8, 2
    %s21 = sadd.s32 1, %s16
    %p22 = scmp.ge.s32.totalorder %s21, 4
    %s23 = scalar_select %p22, 0, %s21
    %s24 = sadd.s32 1, %s15
    %s25 = scalar_select %p22, %s24, %s15
    %p26 = scmp.ge.s32.totalorder %s25, 2
    %s27 = scalar_select %p26, 0, %s25
    %s28 = ssub.s32 %s15, %s27
    %p29 = scmp.eq.s32.totalorder %s28, 0
    %s31 = sadd.s32 %s30, 1
    %s32 = scalar_select %p29, %s30, %s31
    %p35 = pneg %p29
    %p36 = scmp.eq.s32.totalorder %s8, 7
    %p37 = por %p35, %p36
    %p38 = scmp.ne.s32.totalorder %s30, %s33
    %p39 = scmp.eq.s32.totalorder %s8, 0
    %p40 = por %p38, %p39
    %p41 = scmp.ne.s32.totalorder %s30, %s33
    %p42 = scmp.eq.s32.totalorder %s13, 7
    %p43 = por %p41, %p42
    %p44 = scmp.ne.s32.totalorder %s33, %s34
    %p45 = scmp.eq.s32.totalorder %s13, 0
    %p46 = por %p44, %p45
    %p47 = scmp.ne.s32.totalorder %s33, %s34
    %p48 = scmp.eq.s32.totalorder %s14, 7
    %p49 = por %p47, %p48
    %p51 = scmp.ne.s32.totalorder %s34, %s50
    %p52 = scmp.eq.s32.totalorder %s14, 0
    %p53 = por %p51, %p52
    %s54 = smul.u32 %s15, 4
    %s55 = sadd.s32 %s54, %s16
    %s56 = smul.u32 %s27, 4
    %s57 = sadd.s32 %s56, %s23
    %s58 = ssub.s32 %s55, %s57
    %p59 = scmp.eq.s32.totalorder %s58, 0
    %s61 = sadd.s32 %s60, 1
    %s62 = scalar_select %p59, %s60, %s61
    %p65 = pneg %p59
    %p66 = scmp.eq.s32.totalorder %s8, 7
    %p67 = por %p65, %p66
    %p68 = scmp.ne.s32.totalorder %s60, %s63
    %p69 = scmp.eq.s32.totalorder %s8, 0
    %p70 = por %p68, %p69
    %p71 = scmp.ne.s32.totalorder %s60, %s63
    %p72 = scmp.eq.s32.totalorder %s13, 7
    %p73 = por %p71, %p72
    %p74 = scmp.ne.s32.totalorder %s63, %s64
    %p75 = scmp.eq.s32.totalorder %s13, 0
    %p76 = por %p74, %p75
    %p77 = scmp.ne.s32.totalorder %s63, %s64
    %p78 = scmp.eq.s32.totalorder %s14, 7
    %p79 = por %p77, %p78
    %p81 = scmp.ne.s32.totalorder %s64, %s80
    %p82 = scmp.eq.s32.totalorder %s14, 0
    %p83 = por %p81, %p82
    %s84 = ssub.s32 %s15, %s27
    %s85 = ssub.s32 %s16, %s23
    %s86 = sor.u32 %s84, %s85
    %p87 = scmp.eq.s32.totalorder %s86, 0
    %s89 = sadd.s32 %s88, 1
    %s90 = scalar_select %p87, %s88, %s89
    %p93 = pneg %p87
    %p94 = scmp.eq.s32.totalorder %s8, 7
    %p95 = por %p93, %p94
    %p96 = scmp.ne.s32.totalorder %s88, %s91
    %p97 = scmp.eq.s32.totalorder %s8, 0
    %p98 = por %p96, %p97
    %p99 = scmp.ne.s32.totalorder %s88, %s91
    %p100 = scmp.eq.s32.totalorder %s13, 7
    %p101 = por %p99, %p100
    %p102 = scmp.ne.s32.totalorder %s91, %s92
    %p103 = scmp.eq.s32.totalorder %s13, 0
    %p104 = por %p102, %p103
    %p105 = scmp.ne.s32.totalorder %s91, %s92
    %p106 = scmp.eq.s32.totalorder %s14, 7
    %p107 = por %p105, %p106
    %p109 = scmp.ne.s32.totalorder %s92, %s108
    %p110 = scmp.eq.s32.totalorder %s14, 0
    %p111 = por %p109, %p110
    %p112 = scmp.le.s32.totalorder 1, %s8
    %p113 = scmp.lt.s32.totalorder %s8, 9
    %p114 = pnand %p112, %p113
    %p115 = pneg %p114
    // Predicated region
    $region9: #{tpu_custom_call.1} parent=5 // pred_check
      _
    $region10: #{tpu_custom_call.1} parent=5 // pred_check_branch
      %117 = sbr.rel (%p114) target = $region12
    $region11: #{tpu_custom_call.1} parent=5 // pred_region
      %s118 = ssub.s32 %s8, 1
    $region12: #{tpu_custom_call.1} parent=5 // pred_fallthru
      _
    %p119 = scmp.lt.s32.totalorder %s8, 8
    // Predicated region
    $region13: #{tpu_custom_call.1} parent=5 // pred_check
      %p120 = pneg %p119
    $region14: #{tpu_custom_call.1} parent=5 // pred_check_branch
      %122 = sbr.rel (%p120) target = $region16
    $region15: #{tpu_custom_call.1} parent=5 // pred_region
      // Predicated region
      $region17: #{tpu_custom_call.1} parent=15 // pred_check
        %p123 = pneg %p40
      $region18: #{tpu_custom_call.1} parent=15 // pred_check_branch
        %125 = sbr.rel (%p123) target = $region20
      $region19: #{tpu_custom_call.1} parent=15 // pred_region
        %p126 = scmp.lt.s32.totalorder %s15, 1
        %s127 = scalar_select %p126, %s15, 1
        %s128 = smul.addr %s127, 64
        %s129 = smul.addr %s128, 8
        %s130 = scalar_lea.vmem %s0, %s129
      $region20: #{tpu_custom_call.1} parent=15 // pred_fallthru
        _
      // Predicated region
      $region21: #{tpu_custom_call.1} parent=15 // pred_check
        %p131 = pneg %p70
      $region22: #{tpu_custom_call.1} parent=15 // pred_check_branch
        %133 = sbr.rel (%p131) target = $region24
      $region23: #{tpu_custom_call.1} parent=15 // pred_region
        %s134 = smul.u32 %s15, 4
        %s135 = sadd.s32 %s134, %s16
        %s136 = smul.u32 4, %s135
        %p137 = scmp.lt.s32.totalorder %s136, 31
        %s138 = scalar_select %p137, %s136, 31
        %s139 = smul.addr %s138, 16
        %s140 = smul.addr %s139, 8
        %s141 = scalar_lea.vmem %s1, %s140
        %s142 = smul.u32 %s15, 4
        %s143 = sadd.s32 %s142, %s16
        %s144 = smul.u32 4, %s143
      $region24: #{tpu_custom_call.1} parent=15 // pred_fallthru
        _
    $region16: #{tpu_custom_call.1} parent=5 // pred_fallthru
      _
    %p145 = scmp.le.s32.totalorder 1, %s8
    %p146 = scmp.lt.s32.totalorder %s8, 9
    %p147 = pnand %p145, %p146
    %p148 = pneg %p147
    // Predicated region
    $region25: #{tpu_custom_call.1} parent=5 // pred_check
      _
    $region26: #{tpu_custom_call.1} parent=5 // pred_check_branch
      %150 = sbr.rel (%p147) target = $region28
    $region27: #{tpu_custom_call.1} parent=5 // pred_region
      %s151 = ssub.s32 %s8, 1
      %p152 = scmp.lt.s32.totalorder %s17, 1
      %s153 = scalar_select %p152, %s17, 1
      %s154 = smul.addr %s153, 64
      %s155 = smul.addr %s154, 8
      %s156 = scalar_lea.vmem %s0, %s155
      %p157 = pneg %p46
      %p158 = pneg %p43
      %s159 = smul.u32 %s17, 4
      %s160 = sadd.s32 %s159, %s18
      %s161 = smul.u32 4, %s160
      %p162 = scmp.lt.s32.totalorder %s161, 31
      %s163 = scalar_select %p162, %s161, 31
      %s164 = smul.addr %s163, 16
      %s165 = smul.addr %s164, 8
      %s166 = scalar_lea.vmem %s1, %s165
      %p167 = pneg %p76
      %p168 = pneg %p73
      %p169 = pneg %p104
      %p170 = pneg %p101
      %s171 = smul.u32 8, %s18
      %p172 = scmp.lt.s32.totalorder %s17, 1
      %s173 = scalar_select %p172, %s17, 1
      %p174 = scmp.lt.s32.totalorder %s171, 31
      %s175 = scalar_select %p174, %s171, 31
      %s176 = smul.addr %s175, 4
      %s177 = smul.addr %s173, 128
      %s178 = sadd.s32 %s176, %s177
      %s179 = smul.addr %s178, 4
      %s180 = scalar_lea.vmem %s2, %s179
      %p181 = scmp.lt.s32.totalorder %s17, 1
      %s182 = scalar_select %p181, %s17, 1
      %s183 = smul.addr %s182, 64
      %s184 = smul.addr %s183, 8
      %s185 = scalar_lea.vmem %s0, %s184
      %s186 = smul.u32 %s17, 4
      %s187 = sadd.s32 %s186, %s18
      %s188 = smul.u32 4, %s187
      %p189 = scmp.lt.s32.totalorder %s188, 31
      %s190 = scalar_select %p189, %s188, 31
      %s191 = smul.addr %s190, 16
      %s192 = smul.addr %s191, 8
      %s193 = scalar_lea.vmem %s1, %s192
      %s194 = smul.u32 %s17, 4
      %s195 = sadd.s32 %s194, %s18
      %s196 = smul.u32 4, %s195
      %s197 = smul.u32 8, %s18
      %p198 = scmp.lt.s32.totalorder %s17, 1
      %s199 = scalar_select %p198, %s17, 1
      %p200 = scmp.lt.s32.totalorder %s197, 31
      %s201 = scalar_select %p200, %s197, 31
      %s202 = smul.addr %s201, 4
      %s203 = smul.addr %s199, 128
      %s204 = sadd.s32 %s202, %s203
      %s205 = smul.addr %s204, 4
      %s206 = scalar_lea.vmem %s2, %s205
      %s207 = smul.u32 8, %s18
      %s208 = smul.u32 %s18, 8
      %s209 = scalar_lea.vmem %s185, %s208
      %v210 = vld [vmem:[%s209] sm:$0xff]
      %v211 = vld [vmem:[%s209 + $0x20] sm:$0xff]
      %v212 = vld [vmem:[%s209 + $0x40] sm:$0xff]
      %v213 = vld [vmem:[%s209 + $0x60] sm:$0xff]
      %v214 = vld [vmem:[%s209 + $0x80] sm:$0xff]
      %v215 = vld [vmem:[%s209 + $0xa0] sm:$0xff]
      %v216 = vld [vmem:[%s209 + $0xc0] sm:$0xff]
      %v217 = vld [vmem:[%s209 + $0xe0] sm:$0xff]
      %v218 = vld [vmem:[%s209 + $0x100] sm:$0xff]
      %v219 = vld [vmem:[%s209 + $0x120] sm:$0xff]
      %v220 = vld [vmem:[%s209 + $0x140] sm:$0xff]
      %v221 = vld [vmem:[%s209 + $0x160] sm:$0xff]
      %v222 = vld [vmem:[%s209 + $0x180] sm:$0xff]
      %v223 = vld [vmem:[%s209 + $0x1a0] sm:$0xff]
      %v224 = vld [vmem:[%s209 + $0x1c0] sm:$0xff]
      %v225 = vld [vmem:[%s209 + $0x1e0] sm:$0xff]
      %v226 = vld [vmem:[%s193] sm:$0xff]
      %v227 = vld [vmem:[%s193 + $0x8] sm:$0xff]
      %v228 = vld [vmem:[%s193 + $0x10] sm:$0xff]
      %v229 = vld [vmem:[%s193 + $0x18] sm:$0xff]
      %v230 = vld [vmem:[%s193 + $0x20] sm:$0xff]
      %v231 = vld [vmem:[%s193 + $0x28] sm:$0xff]
      %v232 = vld [vmem:[%s193 + $0x30] sm:$0xff]
      %v233 = vld [vmem:[%s193 + $0x38] sm:$0xff]
      %v234 = vld [vmem:[%s193 + $0x40] sm:$0xff]
      %v235 = vld [vmem:[%s193 + $0x48] sm:$0xff]
      %v236 = vld [vmem:[%s193 + $0x50] sm:$0xff]
      %v237 = vld [vmem:[%s193 + $0x58] sm:$0xff]
      %v238 = vld [vmem:[%s193 + $0x60] sm:$0xff]
      %v239 = vld [vmem:[%s193 + $0x68] sm:$0xff]
      %v240 = vld [vmem:[%s193 + $0x70] sm:$0xff]
      %v241 = vld [vmem:[%s193 + $0x78] sm:$0xff]
      %v242 = vadd.f32 %v210, %v226
      %v243 = vadd.f32 %v211, %v227
      %v244 = vadd.f32 %v212, %v228
      %v245 = vadd.f32 %v213, %v229
      %v246 = vadd.f32 %v214, %v230
      %v247 = vadd.f32 %v215, %v231
      %v248 = vadd.f32 %v216, %v232
      %v249 = vadd.f32 %v217, %v233
      %v250 = vadd.f32 %v218, %v234
      %v251 = vadd.f32 %v219, %v235
      %v252 = vadd.f32 %v220, %v236
      %v253 = vadd.f32 %v221, %v237
      %v254 = vadd.f32 %v222, %v238
      %v255 = vadd.f32 %v223, %v239
      %v256 = vadd.f32 %v224, %v240
      %v257 = vadd.f32 %v225, %v241
      %v258 = vcombine.low %v242, %v244
      %v259 = vcombine.high %v242, %v244
      %v261 = vunpack.c.l.s4 1983009808
      %v262 = vunpack.c.0.s8 %v261
      %v263 = vlaneseq
      %v264 = vshrl.u32 %v263, 7
      %v265 = vsub.s32 %v262, %v264
      %v266 = vrot.slane %v258, %v265
      %v268 = vunpack.c.l.s4 1983009808
      %v269 = vunpack.c.0.s8 %v268
      %v270 = vlaneseq
      %v271 = vshrl.u32 %v270, 7
      %v272 = vsub.s32 %v269, %v271
      %v273 = vrot.slane %v259, %v272
      %v274 = vcombine.low %v243, %v245
      %v275 = vcombine.high %v243, %v245
      %v277 = vunpack.c.l.s4 1983009808
      %v278 = vunpack.c.0.s8 %v277
      %v279 = vlaneseq
      %v280 = vshrl.u32 %v279, 7
      %v281 = vsub.s32 %v278, %v280
      %v282 = vrot.slane %v274, %v281
      %v284 = vunpack.c.l.s4 1983009808
      %v285 = vunpack.c.0.s8 %v284
      %v286 = vlaneseq
      %v287 = vshrl.u32 %v286, 7
      %v288 = vsub.s32 %v285, %v287
      %v289 = vrot.slane %v275, %v288
      %v290 = vcombine.low %v246, %v248
      %v291 = vcombine.high %v246, %v248
      %v293 = vunpack.c.l.s4 1983009808
      %v294 = vunpack.c.0.s8 %v293
      %v295 = vlaneseq
      %v296 = vshrl.u32 %v295, 7
      %v297 = vsub.s32 %v294, %v296
      %v298 = vrot.slane %v290, %v297
      %v300 = vunpack.c.l.s4 1983009808
      %v301 = vunpack.c.0.s8 %v300
      %v302 = vlaneseq
      %v303 = vshrl.u32 %v302, 7
      %v304 = vsub.s32 %v301, %v303
      %v305 = vrot.slane %v291, %v304
      %v306 = vcombine.low %v247, %v249
      %v307 = vcombine.high %v247, %v249
      %v309 = vunpack.c.l.s4 1983009808
      %v310 = vunpack.c.0.s8 %v309
      %v311 = vlaneseq
      %v312 = vshrl.u32 %v311, 7
      %v313 = vsub.s32 %v310, %v312
      %v314 = vrot.slane %v306, %v313
      %v316 = vunpack.c.l.s4 1983009808
      %v317 = vunpack.c.0.s8 %v316
      %v318 = vlaneseq
      %v319 = vshrl.u32 %v318, 7
      %v320 = vsub.s32 %v317, %v319
      %v321 = vrot.slane %v307, %v320
      %v322 = vcombine.low %v266, %v282
      %v323 = vcombine.high %v266, %v282
      %v325 = vunpack.c.l.s4 1934713408
      %v326 = vunpack.c.0.s8 %v325
      %v327 = vlaneseq
      %v328 = vshrl.u32 %v327, 7
      %v329 = vsub.s32 %v326, %v328
      %v330 = vrot.slane %v322, %v329
      %v332 = vunpack.c.l.s4 1934713408
      %v333 = vunpack.c.0.s8 %v332
      %v334 = vlaneseq
      %v335 = vshrl.u32 %v334, 7
      %v336 = vsub.s32 %v333, %v335
      %v337 = vrot.slane %v323, %v336
      %v338 = vcombine.low %v273, %v289
      %v339 = vcombine.high %v273, %v289
      %v341 = vunpack.c.l.s4 1934713408
      %v342 = vunpack.c.0.s8 %v341
      %v343 = vlaneseq
      %v344 = vshrl.u32 %v343, 7
      %v345 = vsub.s32 %v342, %v344
      %v346 = vrot.slane %v338, %v345
      %v348 = vunpack.c.l.s4 1934713408
      %v349 = vunpack.c.0.s8 %v348
      %v350 = vlaneseq
      %v351 = vshrl.u32 %v350, 7
      %v352 = vsub.s32 %v349, %v351
      %v353 = vrot.slane %v339, %v352
      %v354 = vcombine.low %v298, %v314
      %v355 = vcombine.high %v298, %v314
      %v357 = vunpack.c.l.s4 1934713408
      %v358 = vunpack.c.0.s8 %v357
      %v359 = vlaneseq
      %v360 = vshrl.u32 %v359, 7
      %v361 = vsub.s32 %v358, %v360
      %v362 = vrot.slane %v354, %v361
      %v364 = vunpack.c.l.s4 1934713408
      %v365 = vunpack.c.0.s8 %v364
      %v366 = vlaneseq
      %v367 = vshrl.u32 %v366, 7
      %v368 = vsub.s32 %v365, %v367
      %v369 = vrot.slane %v355, %v368
      %v370 = vcombine.low %v305, %v321
      %v371 = vcombine.high %v305, %v321
      %v373 = vunpack.c.l.s4 1934713408
      %v374 = vunpack.c.0.s8 %v373
      %v375 = vlaneseq
      %v376 = vshrl.u32 %v375, 7
      %v377 = vsub.s32 %v374, %v376
      %v378 = vrot.slane %v370, %v377
      %v380 = vunpack.c.l.s4 1934713408
      %v381 = vunpack.c.0.s8 %v380
      %v382 = vlaneseq
      %v383 = vshrl.u32 %v382, 7
      %v384 = vsub.s32 %v381, %v383
      %v385 = vrot.slane %v371, %v384
      %v386 = vcombine.low %v330, %v362
      %v387 = vcombine.high %v330, %v362
      %v388 = vcombine.low %v337, %v369
      %v389 = vcombine.high %v337, %v369
      %v390 = vcombine.low %v346, %v378
      %v391 = vcombine.high %v346, %v378
      %v392 = vcombine.low %v353, %v385
      %v393 = vcombine.high %v353, %v385
      %v394 = vcombine.low %v250, %v252
      %v395 = vcombine.high %v250, %v252
      %v397 = vunpack.c.l.s4 1983009808
      %v398 = vunpack.c.0.s8 %v397
      %v399 = vlaneseq
      %v400 = vshrl.u32 %v399, 7
      %v401 = vsub.s32 %v398, %v400
      %v402 = vrot.slane %v394, %v401
      %v404 = vunpack.c.l.s4 1983009808
      %v405 = vunpack.c.0.s8 %v404
      %v406 = vlaneseq
      %v407 = vshrl.u32 %v406, 7
      %v408 = vsub.s32 %v405, %v407
      %v409 = vrot.slane %v395, %v408
      %v410 = vcombine.low %v251, %v253
      %v411 = vcombine.high %v251, %v253
      %v413 = vunpack.c.l.s4 1983009808
      %v414 = vunpack.c.0.s8 %v413
      %v415 = vlaneseq
      %v416 = vshrl.u32 %v415, 7
      %v417 = vsub.s32 %v414, %v416
      %v418 = vrot.slane %v410, %v417
      %v420 = vunpack.c.l.s4 1983009808
      %v421 = vunpack.c.0.s8 %v420
      %v422 = vlaneseq
      %v423 = vshrl.u32 %v422, 7
      %v424 = vsub.s32 %v421, %v423
      %v425 = vrot.slane %v411, %v424
      %v426 = vcombine.low %v254, %v256
      %v427 = vcombine.high %v254, %v256
      %v429 = vunpack.c.l.s4 1983009808
      %v430 = vunpack.c.0.s8 %v429
      %v431 = vlaneseq
      %v432 = vshrl.u32 %v431, 7
      %v433 = vsub.s32 %v430, %v432
      %v434 = vrot.slane %v426, %v433
      %v436 = vunpack.c.l.s4 1983009808
      %v437 = vunpack.c.0.s8 %v436
      %v438 = vlaneseq
      %v439 = vshrl.u32 %v438, 7
      %v440 = vsub.s32 %v437, %v439
      %v441 = vrot.slane %v427, %v440
      %v442 = vcombine.low %v255, %v257
      %v443 = vcombine.high %v255, %v257
      %v445 = vunpack.c.l.s4 1983009808
      %v446 = vunpack.c.0.s8 %v445
      %v447 = vlaneseq
      %v448 = vshrl.u32 %v447, 7
      %v449 = vsub.s32 %v446, %v448
      %v450 = vrot.slane %v442, %v449
      %v452 = vunpack.c.l.s4 1983009808
      %v453 = vunpack.c.0.s8 %v452
      %v454 = vlaneseq
      %v455 = vshrl.u32 %v454, 7
      %v456 = vsub.s32 %v453, %v455
      %v457 = vrot.slane %v443, %v456
      %v458 = vcombine.low %v402, %v418
      %v459 = vcombine.high %v402, %v418
      %v461 = vunpack.c.l.s4 1934713408
      %v462 = vunpack.c.0.s8 %v461
      %v463 = vlaneseq
      %v464 = vshrl.u32 %v463, 7
      %v465 = vsub.s32 %v462, %v464
      %v466 = vrot.slane %v458, %v465
      %v468 = vunpack.c.l.s4 1934713408
      %v469 = vunpack.c.0.s8 %v468
      %v470 = vlaneseq
      %v471 = vshrl.u32 %v470, 7
      %v472 = vsub.s32 %v469, %v471
      %v473 = vrot.slane %v459, %v472
      %v474 = vcombine.low %v409, %v425
      %v475 = vcombine.high %v409, %v425
      %v477 = vunpack.c.l.s4 1934713408
      %v478 = vunpack.c.0.s8 %v477
      %v479 = vlaneseq
      %v480 = vshrl.u32 %v479, 7
      %v481 = vsub.s32 %v478, %v480
      %v482 = vrot.slane %v474, %v481
      %v484 = vunpack.c.l.s4 1934713408
      %v485 = vunpack.c.0.s8 %v484
      %v486 = vlaneseq
      %v487 = vshrl.u32 %v486, 7
      %v488 = vsub.s32 %v485, %v487
      %v489 = vrot.slane %v475, %v488
      %v490 = vcombine.low %v434, %v450
      %v491 = vcombine.high %v434, %v450
      %v493 = vunpack.c.l.s4 1934713408
      %v494 = vunpack.c.0.s8 %v493
      %v495 = vlaneseq
      %v496 = vshrl.u32 %v495, 7
      %v497 = vsub.s32 %v494, %v496
      %v498 = vrot.slane %v490, %v497
      %v500 = vunpack.c.l.s4 1934713408
      %v501 = vunpack.c.0.s8 %v500
      %v502 = vlaneseq
      %v503 = vshrl.u32 %v502, 7
      %v504 = vsub.s32 %v501, %v503
      %v505 = vrot.slane %v491, %v504
      %v506 = vcombine.low %v441, %v457
      %v507 = vcombine.high %v441, %v457
      %v509 = vunpack.c.l.s4 1934713408
      %v510 = vunpack.c.0.s8 %v509
      %v511 = vlaneseq
      %v512 = vshrl.u32 %v511, 7
      %v513 = vsub.s32 %v510, %v512
      %v514 = vrot.slane %v506, %v513
      %v516 = vunpack.c.l.s4 1934713408
      %v517 = vunpack.c.0.s8 %v516
      %v518 = vlaneseq
      %v519 = vshrl.u32 %v518, 7
      %v520 = vsub.s32 %v517, %v519
      %v521 = vrot.slane %v507, %v520
      %v522 = vcombine.low %v466, %v498
      %v523 = vcombine.high %v466, %v498
      %v524 = vcombine.low %v473, %v505
      %v525 = vcombine.high %v473, %v505
      %v526 = vcombine.low %v482, %v514
      %v527 = vcombine.high %v482, %v514
      %v528 = vcombine.low %v489, %v521
      %v529 = vcombine.high %v489, %v521
      %532 = vrot.lane.b32.xlu0 %v387, 8
      %v533 = vpop.permute.xlu0 %532
      %534 = vrot.lane.b32.xlu0 %v523, 8
      %v535 = vpop.permute.xlu0 %534
      %540 = vrot.lane.b32.xlu0 %v388, 16
      %v541 = vpop.permute.xlu0 %540
      %542 = vrot.lane.b32.xlu0 %v524, 16
      %v543 = vpop.permute.xlu0 %542
      %548 = vrot.lane.b32.xlu0 %v389, 24
      %v549 = vpop.permute.xlu0 %548
      %550 = vrot.lane.b32.xlu0 %v525, 24
      %v551 = vpop.permute.xlu0 %550
      %556 = vrot.lane.b32.xlu0 %v390, 32
      %v557 = vpop.permute.xlu0 %556
      %558 = vrot.lane.b32.xlu0 %v526, 32
      %v559 = vpop.permute.xlu0 %558
      %564 = vrot.lane.b32.xlu0 %v391, 40
      %v565 = vpop.permute.xlu0 %564
      %566 = vrot.lane.b32.xlu0 %v527, 40
      %v567 = vpop.permute.xlu0 %566
      %572 = vrot.lane.b32.xlu0 %v392, 48
      %v573 = vpop.permute.xlu0 %572
      %574 = vrot.lane.b32.xlu0 %v528, 48
      %v575 = vpop.permute.xlu0 %574
      %580 = vrot.lane.b32.xlu0 %v393, 56
      %v581 = vpop.permute.xlu0 %580
      %582 = vrot.lane.b32.xlu0 %v529, 56
      %v583 = vpop.permute.xlu0 %582
      %vm586 = vcmask 64512
      %v587 = vsel %vm586, %v386, %v533
      %v588 = vsel %vm586, %v522, %v535
      %vm589 = vcmask 130048
      %v590 = vsel %vm589, %v587, %v541
      %v591 = vsel %vm589, %v588, %v543
      %vm592 = vcmask 195584
      %v593 = vsel %vm592, %v590, %v549
      %v594 = vsel %vm592, %v591, %v551
      %vm595 = vcmask 261120
      %v596 = vsel %vm595, %v593, %v557
      %v597 = vsel %vm595, %v594, %v559
      %vm598 = vcmask 326656
      %v599 = vsel %vm598, %v596, %v565
      %v600 = vsel %vm598, %v597, %v567
      %vm601 = vcmask 392192
      %v602 = vsel %vm601, %v599, %v573
      %v603 = vsel %vm601, %v600, %v575
      %vm604 = vcmask 457728
      %v605 = vsel %vm604, %v602, %v581
      %v606 = vsel %vm604, %v603, %v583
      %607 = vxpose.xlu0.b32.start [1/16] %v605, 128
      %608 = vxpose.xlu0.b32.cont [2/16] %v606, 128
      %609 = vxpose.xlu0.b32.cont [3/16] 0.0, 128
      %610 = vxpose.xlu0.b32.cont [4/16] 0.0, 128
      %611 = vxpose.xlu0.b32.cont [5/16] 0.0, 128
      %612 = vxpose.xlu0.b32.cont [6/16] 0.0, 128
      %613 = vxpose.xlu0.b32.cont [7/16] 0.0, 128
      %614 = vxpose.xlu0.b32.cont [8/16] 0.0, 128
      %615 = vxpose.xlu0.b32.cont [9/16] 0.0, 128
      %616 = vxpose.xlu0.b32.cont [10/16] 0.0, 128
      %617 = vxpose.xlu0.b32.cont [11/16] 0.0, 128
      %618 = vxpose.xlu0.b32.cont [12/16] 0.0, 128
      %619 = vxpose.xlu0.b32.cont [13/16] 0.0, 128
      %620 = vxpose.xlu0.b32.cont [14/16] 0.0, 128
      %621 = vxpose.xlu0.b32.cont [15/16] 0.0, 128
      %622 = vxpose.xlu0.b32.end [16/16] 0.0, 128
      %v623 = vpop.trf.xlu0
      %v624 = vpop.trf.xlu0
      %v625 = vpop.trf.xlu0
      %v626 = vpop.trf.xlu0
      %v627 = vpop.trf.xlu0
      %v628 = vpop.trf.xlu0
      %v629 = vpop.trf.xlu0
      %v630 = vpop.trf.xlu0
      %v631 = vpop.trf.xlu0
      %v632 = vpop.trf.xlu0
      %v633 = vpop.trf.xlu0
      %v634 = vpop.trf.xlu0
      %v635 = vpop.trf.xlu0
      %v636 = vpop.trf.xlu0
      %v637 = vpop.trf.xlu0
      %v638 = vpop.trf.xlu0
      %v639 = vpack.c.bf16 %v623, %v623
      %v640 = vpack.c.bf16 %v624, %v624
      %v641 = vpack.c.bf16 %v625, %v625
      %v642 = vpack.c.bf16 %v626, %v626
      %v643 = vpack.c.bf16 %v627, %v627
      %v644 = vpack.c.bf16 %v628, %v628
      %v645 = vpack.c.bf16 %v629, %v629
      %v646 = vpack.c.bf16 %v630, %v630
      %vm647 = vcmask 125952
      %648 = vst.msk [vmem:[%s206] sm:$0xf] %vm647, %v639
      %649 = vst.msk [vmem:[%s206 + $0x10] sm:$0xf] %vm647, %v640
      %650 = vst.msk [vmem:[%s206 + $0x20] sm:$0xf] %vm647, %v641
      %651 = vst.msk [vmem:[%s206 + $0x30] sm:$0xf] %vm647, %v642
      %652 = vst.msk [vmem:[%s206 + $0x40] sm:$0xf] %vm647, %v643
      %653 = vst.msk [vmem:[%s206 + $0x50] sm:$0xf] %vm647, %v644
      %654 = vst.msk [vmem:[%s206 + $0x60] sm:$0xf] %vm647, %v645
      %655 = vst.msk [vmem:[%s206 + $0x70] sm:$0xf] %vm647, %v646
      %s656 = scalar_lea.vmem %s193, 128
      %v657 = vld [vmem:[%s656] sm:$0xff]
      %v658 = vld [vmem:[%s656 + $0x8] sm:$0xff]
      %v659 = vld [vmem:[%s656 + $0x10] sm:$0xff]
      %v660 = vld [vmem:[%s656 + $0x18] sm:$0xff]
      %v661 = vld [vmem:[%s656 + $0x20] sm:$0xff]
      %v662 = vld [vmem:[%s656 + $0x28] sm:$0xff]
      %v663 = vld [vmem:[%s656 + $0x30] sm:$0xff]
      %v664 = vld [vmem:[%s656 + $0x38] sm:$0xff]
      %v665 = vld [vmem:[%s656 + $0x40] sm:$0xff]
      %v666 = vld [vmem:[%s656 + $0x48] sm:$0xff]
      %v667 = vld [vmem:[%s656 + $0x50] sm:$0xff]
      %v668 = vld [vmem:[%s656 + $0x58] sm:$0xff]
      %v669 = vld [vmem:[%s656 + $0x60] sm:$0xff]
      %v670 = vld [vmem:[%s656 + $0x68] sm:$0xff]
      %v671 = vld [vmem:[%s656 + $0x70] sm:$0xff]
      %v672 = vld [vmem:[%s656 + $0x78] sm:$0xff]
      %689 = vrot.lane.b32.xlu0 %v657, 8
      %v690 = vpop.permute.xlu0 %689
      %691 = vrot.lane.b32.xlu0 %v658, 8
      %v692 = vpop.permute.xlu0 %691
      %693 = vrot.lane.b32.xlu0 %v659, 8
      %v694 = vpop.permute.xlu0 %693
      %695 = vrot.lane.b32.xlu0 %v660, 8
      %v696 = vpop.permute.xlu0 %695
      %697 = vrot.lane.b32.xlu0 %v661, 8
      %v698 = vpop.permute.xlu0 %697
      %699 = vrot.lane.b32.xlu0 %v662, 8
      %v700 = vpop.permute.xlu0 %699
      %701 = vrot.lane.b32.xlu0 %v663, 8
      %v702 = vpop.permute.xlu0 %701
      %703 = vrot.lane.b32.xlu0 %v664, 8
      %v704 = vpop.permute.xlu0 %703
      %705 = vrot.lane.b32.xlu0 %v665, 8
      %v706 = vpop.permute.xlu0 %705
      %707 = vrot.lane.b32.xlu0 %v666, 8
      %v708 = vpop.permute.xlu0 %707
      %709 = vrot.lane.b32.xlu0 %v667, 8
      %v710 = vpop.permute.xlu0 %709
      %711 = vrot.lane.b32.xlu0 %v668, 8
      %v712 = vpop.permute.xlu0 %711
      %713 = vrot.lane.b32.xlu0 %v669, 8
      %v714 = vpop.permute.xlu0 %713
      %715 = vrot.lane.b32.xlu0 %v670, 8
      %v716 = vpop.permute.xlu0 %715
      %717 = vrot.lane.b32.xlu0 %v671, 8
      %v718 = vpop.permute.xlu0 %717
      %719 = vrot.lane.b32.xlu0 %v672, 8
      %v720 = vpop.permute.xlu0 %719
      %v737 = vadd.f32 %v210, %v690
      %v738 = vadd.f32 %v211, %v692
      %v739 = vadd.f32 %v212, %v694
      %v740 = vadd.f32 %v213, %v696
      %v741 = vadd.f32 %v214, %v698
      %v742 = vadd.f32 %v215, %v700
      %v743 = vadd.f32 %v216, %v702
      %v744 = vadd.f32 %v217, %v704
      %v745 = vadd.f32 %v218, %v706
      %v746 = vadd.f32 %v219, %v708
      %v747 = vadd.f32 %v220, %v710
      %v748 = vadd.f32 %v221, %v712
      %v749 = vadd.f32 %v222, %v714
      %v750 = vadd.f32 %v223, %v716
      %v751 = vadd.f32 %v224, %v718
      %v752 = vadd.f32 %v225, %v720
      %769 = vrot.lane.b32.xlu0 %v737, 120
      %v770 = vpop.permute.xlu0 %769
      %771 = vrot.lane.b32.xlu0 %v738, 120
      %v772 = vpop.permute.xlu0 %771
      %773 = vrot.lane.b32.xlu0 %v739, 120
      %v774 = vpop.permute.xlu0 %773
      %775 = vrot.lane.b32.xlu0 %v740, 120
      %v776 = vpop.permute.xlu0 %775
      %777 = vrot.lane.b32.xlu0 %v741, 120
      %v778 = vpop.permute.xlu0 %777
      %779 = vrot.lane.b32.xlu0 %v742, 120
      %v780 = vpop.permute.xlu0 %779
      %781 = vrot.lane.b32.xlu0 %v743, 120
      %v782 = vpop.permute.xlu0 %781
      %783 = vrot.lane.b32.xlu0 %v744, 120
      %v784 = vpop.permute.xlu0 %783
      %785 = vrot.lane.b32.xlu0 %v745, 120
      %v786 = vpop.permute.xlu0 %785
      %787 = vrot.lane.b32.xlu0 %v746, 120
      %v788 = vpop.permute.xlu0 %787
      %789 = vrot.lane.b32.xlu0 %v747, 120
      %v790 = vpop.permute.xlu0 %789
      %791 = vrot.lane.b32.xlu0 %v748, 120
      %v792 = vpop.permute.xlu0 %791
      %793 = vrot.lane.b32.xlu0 %v749, 120
      %v794 = vpop.permute.xlu0 %793
      %795 = vrot.lane.b32.xlu0 %v750, 120
      %v796 = vpop.permute.xlu0 %795
      %797 = vrot.lane.b32.xlu0 %v751, 120
      %v798 = vpop.permute.xlu0 %797
      %799 = vrot.lane.b32.xlu0 %v752, 120
      %v800 = vpop.permute.xlu0 %799
      %v817 = vcombine.low %v770, %v774
      %v818 = vcombine.high %v770, %v774
      %v820 = vunpack.c.l.s4 1983009808
      %v821 = vunpack.c.0.s8 %v820
      %v822 = vlaneseq
      %v823 = vshrl.u32 %v822, 7
      %v824 = vsub.s32 %v821, %v823
      %v825 = vrot.slane %v817, %v824
      %v827 = vunpack.c.l.s4 1983009808
      %v828 = vunpack.c.0.s8 %v827
      %v829 = vlaneseq
      %v830 = vshrl.u32 %v829, 7
      %v831 = vsub.s32 %v828, %v830
      %v832 = vrot.slane %v818, %v831
      %v833 = vcombine.low %v772, %v776
      %v834 = vcombine.high %v772, %v776
      %v836 = vunpack.c.l.s4 1983009808
      %v837 = vunpack.c.0.s8 %v836
      %v838 = vlaneseq
      %v839 = vshrl.u32 %v838, 7
      %v840 = vsub.s32 %v837, %v839
      %v841 = vrot.slane %v833, %v840
      %v843 = vunpack.c.l.s4 1983009808
      %v844 = vunpack.c.0.s8 %v843
      %v845 = vlaneseq
      %v846 = vshrl.u32 %v845, 7
      %v847 = vsub.s32 %v844, %v846
      %v848 = vrot.slane %v834, %v847
      %v849 = vcombine.low %v778, %v782
      %v850 = vcombine.high %v778, %v782
      %v852 = vunpack.c.l.s4 1983009808
      %v853 = vunpack.c.0.s8 %v852
      %v854 = vlaneseq
      %v855 = vshrl.u32 %v854, 7
      %v856 = vsub.s32 %v853, %v855
      %v857 = vrot.slane %v849, %v856
      %v859 = vunpack.c.l.s4 1983009808
      %v860 = vunpack.c.0.s8 %v859
      %v861 = vlaneseq
      %v862 = vshrl.u32 %v861, 7
      %v863 = vsub.s32 %v860, %v862
      %v864 = vrot.slane %v850, %v863
      %v865 = vcombine.low %v780, %v784
      %v866 = vcombine.high %v780, %v784
      %v868 = vunpack.c.l.s4 1983009808
      %v869 = vunpack.c.0.s8 %v868
      %v870 = vlaneseq
      %v871 = vshrl.u32 %v870, 7
      %v872 = vsub.s32 %v869, %v871
      %v873 = vrot.slane %v865, %v872
      %v875 = vunpack.c.l.s4 1983009808
      %v876 = vunpack.c.0.s8 %v875
      %v877 = vlaneseq
      %v878 = vshrl.u32 %v877, 7
      %v879 = vsub.s32 %v876, %v878
      %v880 = vrot.slane %v866, %v879
      %v881 = vcombine.low %v825, %v841
      %v882 = vcombine.high %v825, %v841
      %v884 = vunpack.c.l.s4 1934713408
      %v885 = vunpack.c.0.s8 %v884
      %v886 = vlaneseq
      %v887 = vshrl.u32 %v886, 7
      %v888 = vsub.s32 %v885, %v887
      %v889 = vrot.slane %v881, %v888
      %v891 = vunpack.c.l.s4 1934713408
      %v892 = vunpack.c.0.s8 %v891
      %v893 = vlaneseq
      %v894 = vshrl.u32 %v893, 7
      %v895 = vsub.s32 %v892, %v894
      %v896 = vrot.slane %v882, %v895
      %v897 = vcombine.low %v832, %v848
      %v898 = vcombine.high %v832, %v848
      %v900 = vunpack.c.l.s4 1934713408
      %v901 = vunpack.c.0.s8 %v900
      %v902 = vlaneseq
      %v903 = vshrl.u32 %v902, 7
      %v904 = vsub.s32 %v901, %v903
      %v905 = vrot.slane %v897, %v904
      %v907 = vunpack.c.l.s4 1934713408
      %v908 = vunpack.c.0.s8 %v907
      %v909 = vlaneseq
      %v910 = vshrl.u32 %v909, 7
      %v911 = vsub.s32 %v908, %v910
      %v912 = vrot.slane %v898, %v911
      %v913 = vcombine.low %v857, %v873
      %v914 = vcombine.high %v857, %v873
      %v916 = vunpack.c.l.s4 1934713408
      %v917 = vunpack.c.0.s8 %v916
      %v918 = vlaneseq
      %v919 = vshrl.u32 %v918, 7
      %v920 = vsub.s32 %v917, %v919
      %v921 = vrot.slane %v913, %v920
      %v923 = vunpack.c.l.s4 1934713408
      %v924 = vunpack.c.0.s8 %v923
      %v925 = vlaneseq
      %v926 = vshrl.u32 %v925, 7
      %v927 = vsub.s32 %v924, %v926
      %v928 = vrot.slane %v914, %v927
      %v929 = vcombine.low %v864, %v880
      %v930 = vcombine.high %v864, %v880
      %v932 = vunpack.c.l.s4 1934713408
      %v933 = vunpack.c.0.s8 %v932
      %v934 = vlaneseq
      %v935 = vshrl.u32 %v934, 7
      %v936 = vsub.s32 %v933, %v935
      %v937 = vrot.slane %v929, %v936
      %v939 = vunpack.c.l.s4 1934713408
      %v940 = vunpack.c.0.s8 %v939
      %v941 = vlaneseq
      %v942 = vshrl.u32 %v941, 7
      %v943 = vsub.s32 %v940, %v942
      %v944 = vrot.slane %v930, %v943
      %v945 = vcombine.low %v889, %v921
      %v946 = vcombine.high %v889, %v921
      %v947 = vcombine.low %v896, %v928
      %v948 = vcombine.high %v896, %v928
      %v949 = vcombine.low %v905, %v937
      %v950 = vcombine.high %v905, %v937
      %v951 = vcombine.low %v912, %v944
      %v952 = vcombine.high %v912, %v944
      %v953 = vcombine.low %v786, %v790
      %v954 = vcombine.high %v786, %v790
      %v956 = vunpack.c.l.s4 1983009808
      %v957 = vunpack.c.0.s8 %v956
      %v958 = vlaneseq
      %v959 = vshrl.u32 %v958, 7
      %v960 = vsub.s32 %v957, %v959
      %v961 = vrot.slane %v953, %v960
      %v963 = vunpack.c.l.s4 1983009808
      %v964 = vunpack.c.0.s8 %v963
      %v965 = vlaneseq
      %v966 = vshrl.u32 %v965, 7
      %v967 = vsub.s32 %v964, %v966
      %v968 = vrot.slane %v954, %v967
      %v969 = vcombine.low %v788, %v792
      %v970 = vcombine.high %v788, %v792
      %v972 = vunpack.c.l.s4 1983009808
      %v973 = vunpack.c.0.s8 %v972
      %v974 = vlaneseq
      %v975 = vshrl.u32 %v974, 7
      %v976 = vsub.s32 %v973, %v975
      %v977 = vrot.slane %v969, %v976
      %v979 = vunpack.c.l.s4 1983009808
      %v980 = vunpack.c.0.s8 %v979
      %v981 = vlaneseq
      %v982 = vshrl.u32 %v981, 7
      %v983 = vsub.s32 %v980, %v982
      %v984 = vrot.slane %v970, %v983
      %v985 = vcombine.low %v794, %v798
      %v986 = vcombine.high %v794, %v798
      %v988 = vunpack.c.l.s4 1983009808
      %v989 = vunpack.c.0.s8 %v988
      %v990 = vlaneseq
      %v991 = vshrl.u32 %v990, 7
      %v992 = vsub.s32 %v989, %v991
      %v993 = vrot.slane %v985, %v992
      %v995 = vunpack.c.l.s4 1983009808
      %v996 = vunpack.c.0.s8 %v995
      %v997 = vlaneseq
      %v998 = vshrl.u32 %v997, 7
      %v999 = vsub.s32 %v996, %v998
      %v1000 = vrot.slane %v986, %v999
      %v1001 = vcombine.low %v796, %v800
      %v1002 = vcombine.high %v796, %v800
      %v1004 = vunpack.c.l.s4 1983009808
      %v1005 = vunpack.c.0.s8 %v1004
      %v1006 = vlaneseq
      %v1007 = vshrl.u32 %v1006, 7
      %v1008 = vsub.s32 %v1005, %v1007
      %v1009 = vrot.slane %v1001, %v1008
      %v1011 = vunpack.c.l.s4 1983009808
      %v1012 = vunpack.c.0.s8 %v1011
      %v1013 = vlaneseq
      %v1014 = vshrl.u32 %v1013, 7
      %v1015 = vsub.s32 %v1012, %v1014
      %v1016 = vrot.slane %v1002, %v1015
      %v1017 = vcombine.low %v961, %v977
      %v1018 = vcombine.high %v961, %v977
      %v1020 = vunpack.c.l.s4 1934713408
      %v1021 = vunpack.c.0.s8 %v1020
      %v1022 = vlaneseq
      %v1023 = vshrl.u32 %v1022, 7
      %v1024 = vsub.s32 %v1021, %v1023
      %v1025 = vrot.slane %v1017, %v1024
      %v1027 = vunpack.c.l.s4 1934713408
      %v1028 = vunpack.c.0.s8 %v1027
      %v1029 = vlaneseq
      %v1030 = vshrl.u32 %v1029, 7
      %v1031 = vsub.s32 %v1028, %v1030
      %v1032 = vrot.slane %v1018, %v1031
      %v1033 = vcombine.low %v968, %v984
      %v1034 = vcombine.high %v968, %v984
      %v1036 = vunpack.c.l.s4 1934713408
      %v1037 = vunpack.c.0.s8 %v1036
      %v1038 = vlaneseq
      %v1039 = vshrl.u32 %v1038, 7
      %v1040 = vsub.s32 %v1037, %v1039
      %v1041 = vrot.slane %v1033, %v1040
      %v1043 = vunpack.c.l.s4 1934713408
      %v1044 = vunpack.c.0.s8 %v1043
      %v1045 = vlaneseq
      %v1046 = vshrl.u32 %v1045, 7
      %v1047 = vsub.s32 %v1044, %v1046
      %v1048 = vrot.slane %v1034, %v1047
      %v1049 = vcombine.low %v993, %v1009
      %v1050 = vcombine.high %v993, %v1009
      %v1052 = vunpack.c.l.s4 1934713408
      %v1053 = vunpack.c.0.s8 %v1052
      %v1054 = vlaneseq
      %v1055 = vshrl.u32 %v1054, 7
      %v1056 = vsub.s32 %v1053, %v1055
      %v1057 = vrot.slane %v1049, %v1056
      %v1059 = vunpack.c.l.s4 1934713408
      %v1060 = vunpack.c.0.s8 %v1059
      %v1061 = vlaneseq
      %v1062 = vshrl.u32 %v1061, 7
      %v1063 = vsub.s32 %v1060, %v1062
      %v1064 = vrot.slane %v1050, %v1063
      %v1065 = vcombine.low %v1000, %v1016
      %v1066 = vcombine.high %v1000, %v1016
      %v1068 = vunpack.c.l.s4 1934713408
      %v1069 = vunpack.c.0.s8 %v1068
      %v1070 = vlaneseq
      %v1071 = vshrl.u32 %v1070, 7
      %v1072 = vsub.s32 %v1069, %v1071
      %v1073 = vrot.slane %v1065, %v1072
      %v1075 = vunpack.c.l.s4 1934713408
      %v1076 = vunpack.c.0.s8 %v1075
      %v1077 = vlaneseq
      %v1078 = vshrl.u32 %v1077, 7
      %v1079 = vsub.s32 %v1076, %v1078
      %v1080 = vrot.slane %v1066, %v1079
      %v1081 = vcombine.low %v1025, %v1057
      %v1082 = vcombine.high %v1025, %v1057
      %v1083 = vcombine.low %v1032, %v1064
      %v1084 = vcombine.high %v1032, %v1064
      %v1085 = vcombine.low %v1041, %v1073
      %v1086 = vcombine.high %v1041, %v1073
      %v1087 = vcombine.low %v1048, %v1080
      %v1088 = vcombine.high %v1048, %v1080
      %1091 = vrot.lane.b32.xlu0 %v946, 8
      %v1092 = vpop.permute.xlu0 %1091
      %1093 = vrot.lane.b32.xlu0 %v1082, 8
      %v1094 = vpop.permute.xlu0 %1093
      %1099 = vrot.lane.b32.xlu0 %v947, 16
      %v1100 = vpop.permute.xlu0 %1099
      %1101 = vrot.lane.b32.xlu0 %v1083, 16
      %v1102 = vpop.permute.xlu0 %1101
      %1107 = vrot.lane.b32.xlu0 %v948, 24
      %v1108 = vpop.permute.xlu0 %1107
      %1109 = vrot.lane.b32.xlu0 %v1084, 24
      %v1110 = vpop.permute.xlu0 %1109
      %1115 = vrot.lane.b32.xlu0 %v949, 32
      %v1116 = vpop.permute.xlu0 %1115
      %1117 = vrot.lane.b32.xlu0 %v1085, 32
      %v1118 = vpop.permute.xlu0 %1117
      %1123 = vrot.lane.b32.xlu0 %v950, 40
      %v1124 = vpop.permute.xlu0 %1123
      %1125 = vrot.lane.b32.xlu0 %v1086, 40
      %v1126 = vpop.permute.xlu0 %1125
      %1131 = vrot.lane.b32.xlu0 %v951, 48
      %v1132 = vpop.permute.xlu0 %1131
      %1133 = vrot.lane.b32.xlu0 %v1087, 48
      %v1134 = vpop.permute.xlu0 %1133
      %1139 = vrot.lane.b32.xlu0 %v952, 56
      %v1140 = vpop.permute.xlu0 %1139
      %1141 = vrot.lane.b32.xlu0 %v1088, 56
      %v1142 = vpop.permute.xlu0 %1141
      %v1145 = vsel %vm586, %v945, %v1092
      %v1146 = vsel %vm586, %v1081, %v1094
      %v1147 = vsel %vm589, %v1145, %v1100
      %v1148 = vsel %vm589, %v1146, %v1102
      %v1149 = vsel %vm592, %v1147, %v1108
      %v1150 = vsel %vm592, %v1148, %v1110
      %v1151 = vsel %vm595, %v1149, %v1116
      %v1152 = vsel %vm595, %v1150, %v1118
      %v1153 = vsel %vm598, %v1151, %v1124
      %v1154 = vsel %vm598, %v1152, %v1126
      %v1155 = vsel %vm601, %v1153, %v1132
      %v1156 = vsel %vm601, %v1154, %v1134
      %v1157 = vsel %vm604, %v1155, %v1140
      %v1158 = vsel %vm604, %v1156, %v1142
      %1159 = vxpose.xlu0.b32.start [1/16] %v1157, 128
      %1160 = vxpose.xlu0.b32.cont [2/16] %v1158, 128
      %1161 = vxpose.xlu0.b32.cont [3/16] 0.0, 128
      %1162 = vxpose.xlu0.b32.cont [4/16] 0.0, 128
      %1163 = vxpose.xlu0.b32.cont [5/16] 0.0, 128
      %1164 = vxpose.xlu0.b32.cont [6/16] 0.0, 128
      %1165 = vxpose.xlu0.b32.cont [7/16] 0.0, 128
      %1166 = vxpose.xlu0.b32.cont [8/16] 0.0, 128
      %1167 = vxpose.xlu0.b32.cont [9/16] 0.0, 128
      %1168 = vxpose.xlu0.b32.cont [10/16] 0.0, 128
      %1169 = vxpose.xlu0.b32.cont [11/16] 0.0, 128
      %1170 = vxpose.xlu0.b32.cont [12/16] 0.0, 128
      %1171 = vxpose.xlu0.b32.cont [13/16] 0.0, 128
      %1172 = vxpose.xlu0.b32.cont [14/16] 0.0, 128
      %1173 = vxpose.xlu0.b32.cont [15/16] 0.0, 128
      %1174 = vxpose.xlu0.b32.end [16/16] 0.0, 128
      %v1175 = vpop.trf.xlu0
      %v1176 = vpop.trf.xlu0
      %v1177 = vpop.trf.xlu0
      %v1178 = vpop.trf.xlu0
      %v1179 = vpop.trf.xlu0
      %v1180 = vpop.trf.xlu0
      %v1181 = vpop.trf.xlu0
      %v1182 = vpop.trf.xlu0
      %v1183 = vpop.trf.xlu0
      %v1184 = vpop.trf.xlu0
      %v1185 = vpop.trf.xlu0
      %v1186 = vpop.trf.xlu0
      %v1187 = vpop.trf.xlu0
      %v1188 = vpop.trf.xlu0
      %v1189 = vpop.trf.xlu0
      %v1190 = vpop.trf.xlu0
      %v1191 = vpack.c.bf16 %v1175, %v1175
      %v1192 = vpack.c.bf16 %v1176, %v1176
      %v1193 = vpack.c.bf16 %v1177, %v1177
      %v1194 = vpack.c.bf16 %v1178, %v1178
      %v1195 = vpack.c.bf16 %v1179, %v1179
      %v1196 = vpack.c.bf16 %v1180, %v1180
      %v1197 = vpack.c.bf16 %v1181, %v1181
      %v1198 = vpack.c.bf16 %v1182, %v1182
      %1199 = vst.msk [vmem:[%s206 + $0x4] sm:$0xf] %vm647, %v1191
      %1200 = vst.msk [vmem:[%s206 + $0x14] sm:$0xf] %vm647, %v1192
      %1201 = vst.msk [vmem:[%s206 + $0x24] sm:$0xf] %vm647, %v1193
      %1202 = vst.msk [vmem:[%s206 + $0x34] sm:$0xf] %vm647, %v1194
      %1203 = vst.msk [vmem:[%s206 + $0x44] sm:$0xf] %vm647, %v1195
      %1204 = vst.msk [vmem:[%s206 + $0x54] sm:$0xf] %vm647, %v1196
      %1205 = vst.msk [vmem:[%s206 + $0x64] sm:$0xf] %vm647, %v1197
      %1206 = vst.msk [vmem:[%s206 + $0x74] sm:$0xf] %vm647, %v1198
      %s1207 = scalar_lea.vmem %s193, 256
      %v1208 = vld [vmem:[%s1207] sm:$0xff]
      %v1209 = vld [vmem:[%s1207 + $0x8] sm:$0xff]
      %v1210 = vld [vmem:[%s1207 + $0x10] sm:$0xff]
      %v1211 = vld [vmem:[%s1207 + $0x18] sm:$0xff]
      %v1212 = vld [vmem:[%s1207 + $0x20] sm:$0xff]
      %v1213 = vld [vmem:[%s1207 + $0x28] sm:$0xff]
      %v1214 = vld [vmem:[%s1207 + $0x30] sm:$0xff]
      %v1215 = vld [vmem:[%s1207 + $0x38] sm:$0xff]
      %v1216 = vld [vmem:[%s1207 + $0x40] sm:$0xff]
      %v1217 = vld [vmem:[%s1207 + $0x48] sm:$0xff]
      %v1218 = vld [vmem:[%s1207 + $0x50] sm:$0xff]
      %v1219 = vld [vmem:[%s1207 + $0x58] sm:$0xff]
      %v1220 = vld [vmem:[%s1207 + $0x60] sm:$0xff]
      %v1221 = vld [vmem:[%s1207 + $0x68] sm:$0xff]
      %v1222 = vld [vmem:[%s1207 + $0x70] sm:$0xff]
      %v1223 = vld [vmem:[%s1207 + $0x78] sm:$0xff]
      %1240 = vrot.lane.b32.xlu0 %v1208, 16
      %v1241 = vpop.permute.xlu0 %1240
      %1242 = vrot.lane.b32.xlu0 %v1209, 16
      %v1243 = vpop.permute.xlu0 %1242
      %1244 = vrot.lane.b32.xlu0 %v1210, 16
      %v1245 = vpop.permute.xlu0 %1244
      %1246 = vrot.lane.b32.xlu0 %v1211, 16
      %v1247 = vpop.permute.xlu0 %1246
      %1248 = vrot.lane.b32.xlu0 %v1212, 16
      %v1249 = vpop.permute.xlu0 %1248
      %1250 = vrot.lane.b32.xlu0 %v1213, 16
      %v1251 = vpop.permute.xlu0 %1250
      %1252 = vrot.lane.b32.xlu0 %v1214, 16
      %v1253 = vpop.permute.xlu0 %1252
      %1254 = vrot.lane.b32.xlu0 %v1215, 16
      %v1255 = vpop.permute.xlu0 %1254
      %1256 = vrot.lane.b32.xlu0 %v1216, 16
      %v1257 = vpop.permute.xlu0 %1256
      %1258 = vrot.lane.b32.xlu0 %v1217, 16
      %v1259 = vpop.permute.xlu0 %1258
      %1260 = vrot.lane.b32.xlu0 %v1218, 16
      %v1261 = vpop.permute.xlu0 %1260
      %1262 = vrot.lane.b32.xlu0 %v1219, 16
      %v1263 = vpop.permute.xlu0 %1262
      %1264 = vrot.lane.b32.xlu0 %v1220, 16
      %v1265 = vpop.permute.xlu0 %1264
      %1266 = vrot.lane.b32.xlu0 %v1221, 16
      %v1267 = vpop.permute.xlu0 %1266
      %1268 = vrot.lane.b32.xlu0 %v1222, 16
      %v1269 = vpop.permute.xlu0 %1268
      %1270 = vrot.lane.b32.xlu0 %v1223, 16
      %v1271 = vpop.permute.xlu0 %1270
      %v1288 = vadd.f32 %v210, %v1241
      %v1289 = vadd.f32 %v211, %v1243
      %v1290 = vadd.f32 %v212, %v1245
      %v1291 = vadd.f32 %v213, %v1247
      %v1292 = vadd.f32 %v214, %v1249
      %v1293 = vadd.f32 %v215, %v1251
      %v1294 = vadd.f32 %v216, %v1253
      %v1295 = vadd.f32 %v217, %v1255
      %v1296 = vadd.f32 %v218, %v1257
      %v1297 = vadd.f32 %v219, %v1259
      %v1298 = vadd.f32 %v220, %v1261
      %v1299 = vadd.f32 %v221, %v1263
      %v1300 = vadd.f32 %v222, %v1265
      %v1301 = vadd.f32 %v223, %v1267
      %v1302 = vadd.f32 %v224, %v1269
      %v1303 = vadd.f32 %v225, %v1271
      %1320 = vrot.lane.b32.xlu0 %v1288, 112
      %v1321 = vpop.permute.xlu0 %1320
      %1322 = vrot.lane.b32.xlu0 %v1289, 112
      %v1323 = vpop.permute.xlu0 %1322
      %1324 = vrot.lane.b32.xlu0 %v1290, 112
      %v1325 = vpop.permute.xlu0 %1324
      %1326 = vrot.lane.b32.xlu0 %v1291, 112
      %v1327 = vpop.permute.xlu0 %1326
      %1328 = vrot.lane.b32.xlu0 %v1292, 112
      %v1329 = vpop.permute.xlu0 %1328
      %1330 = vrot.lane.b32.xlu0 %v1293, 112
      %v1331 = vpop.permute.xlu0 %1330
      %1332 = vrot.lane.b32.xlu0 %v1294, 112
      %v1333 = vpop.permute.xlu0 %1332
      %1334 = vrot.lane.b32.xlu0 %v1295, 112
      %v1335 = vpop.permute.xlu0 %1334
      %1336 = vrot.lane.b32.xlu0 %v1296, 112
      %v1337 = vpop.permute.xlu0 %1336
      %1338 = vrot.lane.b32.xlu0 %v1297, 112
      %v1339 = vpop.permute.xlu0 %1338
      %1340 = vrot.lane.b32.xlu0 %v1298, 112
      %v1341 = vpop.permute.xlu0 %1340
      %1342 = vrot.lane.b32.xlu0 %v1299, 112
      %v1343 = vpop.permute.xlu0 %1342
      %1344 = vrot.lane.b32.xlu0 %v1300, 112
      %v1345 = vpop.permute.xlu0 %1344
      %1346 = vrot.lane.b32.xlu0 %v1301, 112
      %v1347 = vpop.permute.xlu0 %1346
      %1348 = vrot.lane.b32.xlu0 %v1302, 112
      %v1349 = vpop.permute.xlu0 %1348
      %1350 = vrot.lane.b32.xlu0 %v1303, 112
      %v1351 = vpop.permute.xlu0 %1350
      %v1368 = vcombine.low %v1321, %v1325
      %v1369 = vcombine.high %v1321, %v1325
      %v1371 = vunpack.c.l.s4 1983009808
      %v1372 = vunpack.c.0.s8 %v1371
      %v1373 = vlaneseq
      %v1374 = vshrl.u32 %v1373, 7
      %v1375 = vsub.s32 %v1372, %v1374
      %v1376 = vrot.slane %v1368, %v1375
      %v1378 = vunpack.c.l.s4 1983009808
      %v1379 = vunpack.c.0.s8 %v1378
      %v1380 = vlaneseq
      %v1381 = vshrl.u32 %v1380, 7
      %v1382 = vsub.s32 %v1379, %v1381
      %v1383 = vrot.slane %v1369, %v1382
      %v1384 = vcombine.low %v1323, %v1327
      %v1385 = vcombine.high %v1323, %v1327
      %v1387 = vunpack.c.l.s4 1983009808
      %v1388 = vunpack.c.0.s8 %v1387
      %v1389 = vlaneseq
      %v1390 = vshrl.u32 %v1389, 7
      %v1391 = vsub.s32 %v1388, %v1390
      %v1392 = vrot.slane %v1384, %v1391
      %v1394 = vunpack.c.l.s4 1983009808
      %v1395 = vunpack.c.0.s8 %v1394
      %v1396 = vlaneseq
      %v1397 = vshrl.u32 %v1396, 7
      %v1398 = vsub.s32 %v1395, %v1397
      %v1399 = vrot.slane %v1385, %v1398
      %v1400 = vcombine.low %v1329, %v1333
      %v1401 = vcombine.high %v1329, %v1333
      %v1403 = vunpack.c.l.s4 1983009808
      %v1404 = vunpack.c.0.s8 %v1403
      %v1405 = vlaneseq
      %v1406 = vshrl.u32 %v1405, 7
      %v1407 = vsub.s32 %v1404, %v1406
      %v1408 = vrot.slane %v1400, %v1407
      %v1410 = vunpack.c.l.s4 1983009808
      %v1411 = vunpack.c.0.s8 %v1410
      %v1412 = vlaneseq
      %v1413 = vshrl.u32 %v1412, 7
      %v1414 = vsub.s32 %v1411, %v1413
      %v1415 = vrot.slane %v1401, %v1414
      %v1416 = vcombine.low %v1331, %v1335
      %v1417 = vcombine.high %v1331, %v1335
      %v1419 = vunpack.c.l.s4 1983009808
      %v1420 = vunpack.c.0.s8 %v1419
      %v1421 = vlaneseq
      %v1422 = vshrl.u32 %v1421, 7
      %v1423 = vsub.s32 %v1420, %v1422
      %v1424 = vrot.slane %v1416, %v1423
      %v1426 = vunpack.c.l.s4 1983009808
      %v1427 = vunpack.c.0.s8 %v1426
      %v1428 = vlaneseq
      %v1429 = vshrl.u32 %v1428, 7
      %v1430 = vsub.s32 %v1427, %v1429
      %v1431 = vrot.slane %v1417, %v1430
      %v1432 = vcombine.low %v1376, %v1392
      %v1433 = vcombine.high %v1376, %v1392
      %v1435 = vunpack.c.l.s4 1934713408
      %v1436 = vunpack.c.0.s8 %v1435
      %v1437 = vlaneseq
      %v1438 = vshrl.u32 %v1437, 7
      %v1439 = vsub.s32 %v1436, %v1438
      %v1440 = vrot.slane %v1432, %v1439
      %v1442 = vunpack.c.l.s4 1934713408
      %v1443 = vunpack.c.0.s8 %v1442
      %v1444 = vlaneseq
      %v1445 = vshrl.u32 %v1444, 7
      %v1446 = vsub.s32 %v1443, %v1445
      %v1447 = vrot.slane %v1433, %v1446
      %v1448 = vcombine.low %v1383, %v1399
      %v1449 = vcombine.high %v1383, %v1399
      %v1451 = vunpack.c.l.s4 1934713408
      %v1452 = vunpack.c.0.s8 %v1451
      %v1453 = vlaneseq
      %v1454 = vshrl.u32 %v1453, 7
      %v1455 = vsub.s32 %v1452, %v1454
      %v1456 = vrot.slane %v1448, %v1455
      %v1458 = vunpack.c.l.s4 1934713408
      %v1459 = vunpack.c.0.s8 %v1458
      %v1460 = vlaneseq
      %v1461 = vshrl.u32 %v1460, 7
      %v1462 = vsub.s32 %v1459, %v1461
      %v1463 = vrot.slane %v1449, %v1462
      %v1464 = vcombine.low %v1408, %v1424
      %v1465 = vcombine.high %v1408, %v1424
      %v1467 = vunpack.c.l.s4 1934713408
      %v1468 = vunpack.c.0.s8 %v1467
      %v1469 = vlaneseq
      %v1470 = vshrl.u32 %v1469, 7
      %v1471 = vsub.s32 %v1468, %v1470
      %v1472 = vrot.slane %v1464, %v1471
      %v1474 = vunpack.c.l.s4 1934713408
      %v1475 = vunpack.c.0.s8 %v1474
      %v1476 = vlaneseq
      %v1477 = vshrl.u32 %v1476, 7
      %v1478 = vsub.s32 %v1475, %v1477
      %v1479 = vrot.slane %v1465, %v1478
      %v1480 = vcombine.low %v1415, %v1431
      %v1481 = vcombine.high %v1415, %v1431
      %v1483 = vunpack.c.l.s4 1934713408
      %v1484 = vunpack.c.0.s8 %v1483
      %v1485 = vlaneseq
      %v1486 = vshrl.u32 %v1485, 7
      %v1487 = vsub.s32 %v1484, %v1486
      %v1488 = vrot.slane %v1480, %v1487
      %v1490 = vunpack.c.l.s4 1934713408
      %v1491 = vunpack.c.0.s8 %v1490
      %v1492 = vlaneseq
      %v1493 = vshrl.u32 %v1492, 7
      %v1494 = vsub.s32 %v1491, %v1493
      %v1495 = vrot.slane %v1481, %v1494
      %v1496 = vcombine.low %v1440, %v1472
      %v1497 = vcombine.high %v1440, %v1472
      %v1498 = vcombine.low %v1447, %v1479
      %v1499 = vcombine.high %v1447, %v1479
      %v1500 = vcombine.low %v1456, %v1488
      %v1501 = vcombine.high %v1456, %v1488
      %v1502 = vcombine.low %v1463, %v1495
      %v1503 = vcombine.high %v1463, %v1495
      %v1504 = vcombine.low %v1337, %v1341
      %v1505 = vcombine.high %v1337, %v1341
      %v1507 = vunpack.c.l.s4 1983009808
      %v1508 = vunpack.c.0.s8 %v1507
      %v1509 = vlaneseq
      %v1510 = vshrl.u32 %v1509, 7
      %v1511 = vsub.s32 %v1508, %v1510
      %v1512 = vrot.slane %v1504, %v1511
      %v1514 = vunpack.c.l.s4 1983009808
      %v1515 = vunpack.c.0.s8 %v1514
      %v1516 = vlaneseq
      %v1517 = vshrl.u32 %v1516, 7
      %v1518 = vsub.s32 %v1515, %v1517
      %v1519 = vrot.slane %v1505, %v1518
      %v1520 = vcombine.low %v1339, %v1343
      %v1521 = vcombine.high %v1339, %v1343
      %v1523 = vunpack.c.l.s4 1983009808
      %v1524 = vunpack.c.0.s8 %v1523
      %v1525 = vlaneseq
      %v1526 = vshrl.u32 %v1525, 7
      %v1527 = vsub.s32 %v1524, %v1526
      %v1528 = vrot.slane %v1520, %v1527
      %v1530 = vunpack.c.l.s4 1983009808
      %v1531 = vunpack.c.0.s8 %v1530
      %v1532 = vlaneseq
      %v1533 = vshrl.u32 %v1532, 7
      %v1534 = vsub.s32 %v1531, %v1533
      %v1535 = vrot.slane %v1521, %v1534
      %v1536 = vcombine.low %v1345, %v1349
      %v1537 = vcombine.high %v1345, %v1349
      %v1539 = vunpack.c.l.s4 1983009808
      %v1540 = vunpack.c.0.s8 %v1539
      %v1541 = vlaneseq
      %v1542 = vshrl.u32 %v1541, 7
      %v1543 = vsub.s32 %v1540, %v1542
      %v1544 = vrot.slane %v1536, %v1543
      %v1546 = vunpack.c.l.s4 1983009808
      %v1547 = vunpack.c.0.s8 %v1546
      %v1548 = vlaneseq
      %v1549 = vshrl.u32 %v1548, 7
      %v1550 = vsub.s32 %v1547, %v1549
      %v1551 = vrot.slane %v1537, %v1550
      %v1552 = vcombine.low %v1347, %v1351
      %v1553 = vcombine.high %v1347, %v1351
      %v1555 = vunpack.c.l.s4 1983009808
      %v1556 = vunpack.c.0.s8 %v1555
      %v1557 = vlaneseq
      %v1558 = vshrl.u32 %v1557, 7
      %v1559 = vsub.s32 %v1556, %v1558
      %v1560 = vrot.slane %v1552, %v1559
      %v1562 = vunpack.c.l.s4 1983009808
      %v1563 = vunpack.c.0.s8 %v1562
      %v1564 = vlaneseq
      %v1565 = vshrl.u32 %v1564, 7
      %v1566 = vsub.s32 %v1563, %v1565
      %v1567 = vrot.slane %v1553, %v1566
      %v1568 = vcombine.low %v1512, %v1528
      %v1569 = vcombine.high %v1512, %v1528
      %v1571 = vunpack.c.l.s4 1934713408
      %v1572 = vunpack.c.0.s8 %v1571
      %v1573 = vlaneseq
      %v1574 = vshrl.u32 %v1573, 7
      %v1575 = vsub.s32 %v1572, %v1574
      %v1576 = vrot.slane %v1568, %v1575
      %v1578 = vunpack.c.l.s4 1934713408
      %v1579 = vunpack.c.0.s8 %v1578
      %v1580 = vlaneseq
      %v1581 = vshrl.u32 %v1580, 7
      %v1582 = vsub.s32 %v1579, %v1581
      %v1583 = vrot.slane %v1569, %v1582
      %v1584 = vcombine.low %v1519, %v1535
      %v1585 = vcombine.high %v1519, %v1535
      %v1587 = vunpack.c.l.s4 1934713408
      %v1588 = vunpack.c.0.s8 %v1587
      %v1589 = vlaneseq
      %v1590 = vshrl.u32 %v1589, 7
      %v1591 = vsub.s32 %v1588, %v1590
      %v1592 = vrot.slane %v1584, %v1591
      %v1594 = vunpack.c.l.s4 1934713408
      %v1595 = vunpack.c.0.s8 %v1594
      %v1596 = vlaneseq
      %v1597 = vshrl.u32 %v1596, 7
      %v1598 = vsub.s32 %v1595, %v1597
      %v1599 = vrot.slane %v1585, %v1598
      %v1600 = vcombine.low %v1544, %v1560
      %v1601 = vcombine.high %v1544, %v1560
      %v1603 = vunpack.c.l.s4 1934713408
      %v1604 = vunpack.c.0.s8 %v1603
      %v1605 = vlaneseq
      %v1606 = vshrl.u32 %v1605, 7
      %v1607 = vsub.s32 %v1604, %v1606
      %v1608 = vrot.slane %v1600, %v1607
      %v1610 = vunpack.c.l.s4 1934713408
      %v1611 = vunpack.c.0.s8 %v1610
      %v1612 = vlaneseq
      %v1613 = vshrl.u32 %v1612, 7
      %v1614 = vsub.s32 %v1611, %v1613
      %v1615 = vrot.slane %v1601, %v1614
      %v1616 = vcombine.low %v1551, %v1567
      %v1617 = vcombine.high %v1551, %v1567
      %v1619 = vunpack.c.l.s4 1934713408
      %v1620 = vunpack.c.0.s8 %v1619
      %v1621 = vlaneseq
      %v1622 = vshrl.u32 %v1621, 7
      %v1623 = vsub.s32 %v1620, %v1622
      %v1624 = vrot.slane %v1616, %v1623
      %v1626 = vunpack.c.l.s4 1934713408
      %v1627 = vunpack.c.0.s8 %v1626
      %v1628 = vlaneseq
      %v1629 = vshrl.u32 %v1628, 7
      %v1630 = vsub.s32 %v1627, %v1629
      %v1631 = vrot.slane %v1617, %v1630
      %v1632 = vcombine.low %v1576, %v1608
      %v1633 = vcombine.high %v1576, %v1608
      %v1634 = vcombine.low %v1583, %v1615
      %v1635 = vcombine.high %v1583, %v1615
      %v1636 = vcombine.low %v1592, %v1624
      %v1637 = vcombine.high %v1592, %v1624
      %v1638 = vcombine.low %v1599, %v1631
      %v1639 = vcombine.high %v1599, %v1631
      %1642 = vrot.lane.b32.xlu0 %v1497, 8
      %v1643 = vpop.permute.xlu0 %1642
      %1644 = vrot.lane.b32.xlu0 %v1633, 8
      %v1645 = vpop.permute.xlu0 %1644
      %1650 = vrot.lane.b32.xlu0 %v1498, 16
      %v1651 = vpop.permute.xlu0 %1650
      %1652 = vrot.lane.b32.xlu0 %v1634, 16
      %v1653 = vpop.permute.xlu0 %1652
      %1658 = vrot.lane.b32.xlu0 %v1499, 24
      %v1659 = vpop.permute.xlu0 %1658
      %1660 = vrot.lane.b32.xlu0 %v1635, 24
      %v1661 = vpop.permute.xlu0 %1660
      %1666 = vrot.lane.b32.xlu0 %v1500, 32
      %v1667 = vpop.permute.xlu0 %1666
      %1668 = vrot.lane.b32.xlu0 %v1636, 32
      %v1669 = vpop.permute.xlu0 %1668
      %1674 = vrot.lane.b32.xlu0 %v1501, 40
      %v1675 = vpop.permute.xlu0 %1674
      %1676 = vrot.lane.b32.xlu0 %v1637, 40
      %v1677 = vpop.permute.xlu0 %1676
      %1682 = vrot.lane.b32.xlu0 %v1502, 48
      %v1683 = vpop.permute.xlu0 %1682
      %1684 = vrot.lane.b32.xlu0 %v1638, 48
      %v1685 = vpop.permute.xlu0 %1684
      %1690 = vrot.lane.b32.xlu0 %v1503, 56
      %v1691 = vpop.permute.xlu0 %1690
      %1692 = vrot.lane.b32.xlu0 %v1639, 56
      %v1693 = vpop.permute.xlu0 %1692
      %v1696 = vsel %vm586, %v1496, %v1643
      %v1697 = vsel %vm586, %v1632, %v1645
      %v1698 = vsel %vm589, %v1696, %v1651
      %v1699 = vsel %vm589, %v1697, %v1653
      %v1700 = vsel %vm592, %v1698, %v1659
      %v1701 = vsel %vm592, %v1699, %v1661
      %v1702 = vsel %vm595, %v1700, %v1667
      %v1703 = vsel %vm595, %v1701, %v1669
      %v1704 = vsel %vm598, %v1702, %v1675
      %v1705 = vsel %vm598, %v1703, %v1677
      %v1706 = vsel %vm601, %v1704, %v1683
      %v1707 = vsel %vm601, %v1705, %v1685
      %v1708 = vsel %vm604, %v1706, %v1691
      %v1709 = vsel %vm604, %v1707, %v1693
      %1710 = vxpose.xlu0.b32.start [1/16] %v1708, 128
      %1711 = vxpose.xlu0.b32.cont [2/16] %v1709, 128
      %1712 = vxpose.xlu0.b32.cont [3/16] 0.0, 128
      %1713 = vxpose.xlu0.b32.cont [4/16] 0.0, 128
      %1714 = vxpose.xlu0.b32.cont [5/16] 0.0, 128
      %1715 = vxpose.xlu0.b32.cont [6/16] 0.0, 128
      %1716 = vxpose.xlu0.b32.cont [7/16] 0.0, 128
      %1717 = vxpose.xlu0.b32.cont [8/16] 0.0, 128
      %1718 = vxpose.xlu0.b32.cont [9/16] 0.0, 128
      %1719 = vxpose.xlu0.b32.cont [10/16] 0.0, 128
      %1720 = vxpose.xlu0.b32.cont [11/16] 0.0, 128
      %1721 = vxpose.xlu0.b32.cont [12/16] 0.0, 128
      %1722 = vxpose.xlu0.b32.cont [13/16] 0.0, 128
      %1723 = vxpose.xlu0.b32.cont [14/16] 0.0, 128
      %1724 = vxpose.xlu0.b32.cont [15/16] 0.0, 128
      %1725 = vxpose.xlu0.b32.end [16/16] 0.0, 128
      %v1726 = vpop.trf.xlu0
      %v1727 = vpop.trf.xlu0
      %v1728 = vpop.trf.xlu0
      %v1729 = vpop.trf.xlu0
      %v1730 = vpop.trf.xlu0
      %v1731 = vpop.trf.xlu0
      %v1732 = vpop.trf.xlu0
      %v1733 = vpop.trf.xlu0
      %v1734 = vpop.trf.xlu0
      %v1735 = vpop.trf.xlu0
      %v1736 = vpop.trf.xlu0
      %v1737 = vpop.trf.xlu0
      %v1738 = vpop.trf.xlu0
      %v1739 = vpop.trf.xlu0
      %v1740 = vpop.trf.xlu0
      %v1741 = vpop.trf.xlu0
      %v1742 = vpack.c.bf16 %v1726, %v1726
      %v1743 = vpack.c.bf16 %v1727, %v1727
      %v1744 = vpack.c.bf16 %v1728, %v1728
      %v1745 = vpack.c.bf16 %v1729, %v1729
      %v1746 = vpack.c.bf16 %v1730, %v1730
      %v1747 = vpack.c.bf16 %v1731, %v1731
      %v1748 = vpack.c.bf16 %v1732, %v1732
      %v1749 = vpack.c.bf16 %v1733, %v1733
      %1750 = vst.msk [vmem:[%s206 + $0x8] sm:$0xf] %vm647, %v1742
      %1751 = vst.msk [vmem:[%s206 + $0x18] sm:$0xf] %vm647, %v1743
      %1752 = vst.msk [vmem:[%s206 + $0x28] sm:$0xf] %vm647, %v1744
      %1753 = vst.msk [vmem:[%s206 + $0x38] sm:$0xf] %vm647, %v1745
      %1754 = vst.msk [vmem:[%s206 + $0x48] sm:$0xf] %vm647, %v1746
      %1755 = vst.msk [vmem:[%s206 + $0x58] sm:$0xf] %vm647, %v1747
      %1756 = vst.msk [vmem:[%s206 + $0x68] sm:$0xf] %vm647, %v1748
      %1757 = vst.msk [vmem:[%s206 + $0x78] sm:$0xf] %vm647, %v1749
      %s1758 = scalar_lea.vmem %s193, 384
      %v1759 = vld [vmem:[%s1758] sm:$0xff]
      %v1760 = vld [vmem:[%s1758 + $0x8] sm:$0xff]
      %v1761 = vld [vmem:[%s1758 + $0x10] sm:$0xff]
      %v1762 = vld [vmem:[%s1758 + $0x18] sm:$0xff]
      %v1763 = vld [vmem:[%s1758 + $0x20] sm:$0xff]
      %v1764 = vld [vmem:[%s1758 + $0x28] sm:$0xff]
      %v1765 = vld [vmem:[%s1758 + $0x30] sm:$0xff]
      %v1766 = vld [vmem:[%s1758 + $0x38] sm:$0xff]
      %v1767 = vld [vmem:[%s1758 + $0x40] sm:$0xff]
      %v1768 = vld [vmem:[%s1758 + $0x48] sm:$0xff]
      %v1769 = vld [vmem:[%s1758 + $0x50] sm:$0xff]
      %v1770 = vld [vmem:[%s1758 + $0x58] sm:$0xff]
      %v1771 = vld [vmem:[%s1758 + $0x60] sm:$0xff]
      %v1772 = vld [vmem:[%s1758 + $0x68] sm:$0xff]
      %v1773 = vld [vmem:[%s1758 + $0x70] sm:$0xff]
      %v1774 = vld [vmem:[%s1758 + $0x78] sm:$0xff]
      %1791 = vrot.lane.b32.xlu0 %v1759, 24
      %v1792 = vpop.permute.xlu0 %1791
      %1793 = vrot.lane.b32.xlu0 %v1760, 24
      %v1794 = vpop.permute.xlu0 %1793
      %1795 = vrot.lane.b32.xlu0 %v1761, 24
      %v1796 = vpop.permute.xlu0 %1795
      %1797 = vrot.lane.b32.xlu0 %v1762, 24
      %v1798 = vpop.permute.xlu0 %1797
      %1799 = vrot.lane.b32.xlu0 %v1763, 24
      %v1800 = vpop.permute.xlu0 %1799
      %1801 = vrot.lane.b32.xlu0 %v1764, 24
      %v1802 = vpop.permute.xlu0 %1801
      %1803 = vrot.lane.b32.xlu0 %v1765, 24
      %v1804 = vpop.permute.xlu0 %1803
      %1805 = vrot.lane.b32.xlu0 %v1766, 24
      %v1806 = vpop.permute.xlu0 %1805
      %1807 = vrot.lane.b32.xlu0 %v1767, 24
      %v1808 = vpop.permute.xlu0 %1807
      %1809 = vrot.lane.b32.xlu0 %v1768, 24
      %v1810 = vpop.permute.xlu0 %1809
      %1811 = vrot.lane.b32.xlu0 %v1769, 24
      %v1812 = vpop.permute.xlu0 %1811
      %1813 = vrot.lane.b32.xlu0 %v1770, 24
      %v1814 = vpop.permute.xlu0 %1813
      %1815 = vrot.lane.b32.xlu0 %v1771, 24
      %v1816 = vpop.permute.xlu0 %1815
      %1817 = vrot.lane.b32.xlu0 %v1772, 24
      %v1818 = vpop.permute.xlu0 %1817
      %1819 = vrot.lane.b32.xlu0 %v1773, 24
      %v1820 = vpop.permute.xlu0 %1819
      %1821 = vrot.lane.b32.xlu0 %v1774, 24
      %v1822 = vpop.permute.xlu0 %1821
      %v1839 = vadd.f32 %v210, %v1792
      %v1840 = vadd.f32 %v211, %v1794
      %v1841 = vadd.f32 %v212, %v1796
      %v1842 = vadd.f32 %v213, %v1798
      %v1843 = vadd.f32 %v214, %v1800
      %v1844 = vadd.f32 %v215, %v1802
      %v1845 = vadd.f32 %v216, %v1804
      %v1846 = vadd.f32 %v217, %v1806
      %v1847 = vadd.f32 %v218, %v1808
      %v1848 = vadd.f32 %v219, %v1810
      %v1849 = vadd.f32 %v220, %v1812
      %v1850 = vadd.f32 %v221, %v1814
      %v1851 = vadd.f32 %v222, %v1816
      %v1852 = vadd.f32 %v223, %v1818
      %v1853 = vadd.f32 %v224, %v1820
      %v1854 = vadd.f32 %v225, %v1822
      %1871 = vrot.lane.b32.xlu0 %v1839, 104
      %v1872 = vpop.permute.xlu0 %1871
      %1873 = vrot.lane.b32.xlu0 %v1840, 104
      %v1874 = vpop.permute.xlu0 %1873
      %1875 = vrot.lane.b32.xlu0 %v1841, 104
      %v1876 = vpop.permute.xlu0 %1875
      %1877 = vrot.lane.b32.xlu0 %v1842, 104
      %v1878 = vpop.permute.xlu0 %1877
      %1879 = vrot.lane.b32.xlu0 %v1843, 104
      %v1880 = vpop.permute.xlu0 %1879
      %1881 = vrot.lane.b32.xlu0 %v1844, 104
      %v1882 = vpop.permute.xlu0 %1881
      %1883 = vrot.lane.b32.xlu0 %v1845, 104
      %v1884 = vpop.permute.xlu0 %1883
      %1885 = vrot.lane.b32.xlu0 %v1846, 104
      %v1886 = vpop.permute.xlu0 %1885
      %1887 = vrot.lane.b32.xlu0 %v1847, 104
      %v1888 = vpop.permute.xlu0 %1887
      %1889 = vrot.lane.b32.xlu0 %v1848, 104
      %v1890 = vpop.permute.xlu0 %1889
      %1891 = vrot.lane.b32.xlu0 %v1849, 104
      %v1892 = vpop.permute.xlu0 %1891
      %1893 = vrot.lane.b32.xlu0 %v1850, 104
      %v1894 = vpop.permute.xlu0 %1893
      %1895 = vrot.lane.b32.xlu0 %v1851, 104
      %v1896 = vpop.permute.xlu0 %1895
      %1897 = vrot.lane.b32.xlu0 %v1852, 104
      %v1898 = vpop.permute.xlu0 %1897
      %1899 = vrot.lane.b32.xlu0 %v1853, 104
      %v1900 = vpop.permute.xlu0 %1899
      %1901 = vrot.lane.b32.xlu0 %v1854, 104
      %v1902 = vpop.permute.xlu0 %1901
      %v1919 = vcombine.low %v1872, %v1876
      %v1920 = vcombine.high %v1872, %v1876
      %v1922 = vunpack.c.l.s4 1983009808
      %v1923 = vunpack.c.0.s8 %v1922
      %v1924 = vlaneseq
      %v1925 = vshrl.u32 %v1924, 7
      %v1926 = vsub.s32 %v1923, %v1925
      %v1927 = vrot.slane %v1919, %v1926
      %v1929 = vunpack.c.l.s4 1983009808
      %v1930 = vunpack.c.0.s8 %v1929
      %v1931 = vlaneseq
      %v1932 = vshrl.u32 %v1931, 7
      %v1933 = vsub.s32 %v1930, %v1932
      %v1934 = vrot.slane %v1920, %v1933
      %v1935 = vcombine.low %v1874, %v1878
      %v1936 = vcombine.high %v1874, %v1878
      %v1938 = vunpack.c.l.s4 1983009808
      %v1939 = vunpack.c.0.s8 %v1938
      %v1940 = vlaneseq
      %v1941 = vshrl.u32 %v1940, 7
      %v1942 = vsub.s32 %v1939, %v1941
      %v1943 = vrot.slane %v1935, %v1942
      %v1945 = vunpack.c.l.s4 1983009808
      %v1946 = vunpack.c.0.s8 %v1945
      %v1947 = vlaneseq
      %v1948 = vshrl.u32 %v1947, 7
      %v1949 = vsub.s32 %v1946, %v1948
      %v1950 = vrot.slane %v1936, %v1949
      %v1951 = vcombine.low %v1880, %v1884
      %v1952 = vcombine.high %v1880, %v1884
      %v1954 = vunpack.c.l.s4 1983009808
      %v1955 = vunpack.c.0.s8 %v1954
      %v1956 = vlaneseq
      %v1957 = vshrl.u32 %v1956, 7
      %v1958 = vsub.s32 %v1955, %v1957
      %v1959 = vrot.slane %v1951, %v1958
      %v1961 = vunpack.c.l.s4 1983009808
      %v1962 = vunpack.c.0.s8 %v1961
      %v1963 = vlaneseq
      %v1964 = vshrl.u32 %v1963, 7
      %v1965 = vsub.s32 %v1962, %v1964
      %v1966 = vrot.slane %v1952, %v1965
      %v1967 = vcombine.low %v1882, %v1886
      %v1968 = vcombine.high %v1882, %v1886
      %v1970 = vunpack.c.l.s4 1983009808
      %v1971 = vunpack.c.0.s8 %v1970
      %v1972 = vlaneseq
      %v1973 = vshrl.u32 %v1972, 7
      %v1974 = vsub.s32 %v1971, %v1973
      %v1975 = vrot.slane %v1967, %v1974
      %v1977 = vunpack.c.l.s4 1983009808
      %v1978 = vunpack.c.0.s8 %v1977
      %v1979 = vlaneseq
      %v1980 = vshrl.u32 %v1979, 7
      %v1981 = vsub.s32 %v1978, %v1980
      %v1982 = vrot.slane %v1968, %v1981
      %v1983 = vcombine.low %v1927, %v1943
      %v1984 = vcombine.high %v1927, %v1943
      %v1986 = vunpack.c.l.s4 1934713408
      %v1987 = vunpack.c.0.s8 %v1986
      %v1988 = vlaneseq
      %v1989 = vshrl.u32 %v1988, 7
      %v1990 = vsub.s32 %v1987, %v1989
      %v1991 = vrot.slane %v1983, %v1990
      %v1993 = vunpack.c.l.s4 1934713408
      %v1994 = vunpack.c.0.s8 %v1993
      %v1995 = vlaneseq
      %v1996 = vshrl.u32 %v1995, 7
      %v1997 = vsub.s32 %v1994, %v1996
      %v1998 = vrot.slane %v1984, %v1997
      %v1999 = vcombine.low %v1934, %v1950
      %v2000 = vcombine.high %v1934, %v1950
      %v2002 = vunpack.c.l.s4 1934713408
      %v2003 = vunpack.c.0.s8 %v2002
      %v2004 = vlaneseq
      %v2005 = vshrl.u32 %v2004, 7
      %v2006 = vsub.s32 %v2003, %v2005
      %v2007 = vrot.slane %v1999, %v2006
      %v2009 = vunpack.c.l.s4 1934713408
      %v2010 = vunpack.c.0.s8 %v2009
      %v2011 = vlaneseq
      %v2012 = vshrl.u32 %v2011, 7
      %v2013 = vsub.s32 %v2010, %v2012
      %v2014 = vrot.slane %v2000, %v2013
      %v2015 = vcombine.low %v1959, %v1975
      %v2016 = vcombine.high %v1959, %v1975
      %v2018 = vunpack.c.l.s4 1934713408
      %v2019 = vunpack.c.0.s8 %v2018
      %v2020 = vlaneseq
      %v2021 = vshrl.u32 %v2020, 7
      %v2022 = vsub.s32 %v2019, %v2021
      %v2023 = vrot.slane %v2015, %v2022
      %v2025 = vunpack.c.l.s4 1934713408
      %v2026 = vunpack.c.0.s8 %v2025
      %v2027 = vlaneseq
      %v2028 = vshrl.u32 %v2027, 7
      %v2029 = vsub.s32 %v2026, %v2028
      %v2030 = vrot.slane %v2016, %v2029
      %v2031 = vcombine.low %v1966, %v1982
      %v2032 = vcombine.high %v1966, %v1982
      %v2034 = vunpack.c.l.s4 1934713408
      %v2035 = vunpack.c.0.s8 %v2034
      %v2036 = vlaneseq
      %v2037 = vshrl.u32 %v2036, 7
      %v2038 = vsub.s32 %v2035, %v2037
      %v2039 = vrot.slane %v2031, %v2038
      %v2041 = vunpack.c.l.s4 1934713408
      %v2042 = vunpack.c.0.s8 %v2041
      %v2043 = vlaneseq
      %v2044 = vshrl.u32 %v2043, 7
      %v2045 = vsub.s32 %v2042, %v2044
      %v2046 = vrot.slane %v2032, %v2045
      %v2047 = vcombine.low %v1991, %v2023
      %v2048 = vcombine.high %v1991, %v2023
      %v2049 = vcombine.low %v1998, %v2030
      %v2050 = vcombine.high %v1998, %v2030
      %v2051 = vcombine.low %v2007, %v2039
      %v2052 = vcombine.high %v2007, %v2039
      %v2053 = vcombine.low %v2014, %v2046
      %v2054 = vcombine.high %v2014, %v2046
      %v2055 = vcombine.low %v1888, %v1892
      %v2056 = vcombine.high %v1888, %v1892
      %v2058 = vunpack.c.l.s4 1983009808
      %v2059 = vunpack.c.0.s8 %v2058
      %v2060 = vlaneseq
      %v2061 = vshrl.u32 %v2060, 7
      %v2062 = vsub.s32 %v2059, %v2061
      %v2063 = vrot.slane %v2055, %v2062
      %v2065 = vunpack.c.l.s4 1983009808
      %v2066 = vunpack.c.0.s8 %v2065
      %v2067 = vlaneseq
      %v2068 = vshrl.u32 %v2067, 7
      %v2069 = vsub.s32 %v2066, %v2068
      %v2070 = vrot.slane %v2056, %v2069
      %v2071 = vcombine.low %v1890, %v1894
      %v2072 = vcombine.high %v1890, %v1894
      %v2074 = vunpack.c.l.s4 1983009808
      %v2075 = vunpack.c.0.s8 %v2074
      %v2076 = vlaneseq
      %v2077 = vshrl.u32 %v2076, 7
      %v2078 = vsub.s32 %v2075, %v2077
      %v2079 = vrot.slane %v2071, %v2078
      %v2081 = vunpack.c.l.s4 1983009808
      %v2082 = vunpack.c.0.s8 %v2081
      %v2083 = vlaneseq
      %v2084 = vshrl.u32 %v2083, 7
      %v2085 = vsub.s32 %v2082, %v2084
      %v2086 = vrot.slane %v2072, %v2085
      %v2087 = vcombine.low %v1896, %v1900
      %v2088 = vcombine.high %v1896, %v1900
      %v2090 = vunpack.c.l.s4 1983009808
      %v2091 = vunpack.c.0.s8 %v2090
      %v2092 = vlaneseq
      %v2093 = vshrl.u32 %v2092, 7
      %v2094 = vsub.s32 %v2091, %v2093
      %v2095 = vrot.slane %v2087, %v2094
      %v2097 = vunpack.c.l.s4 1983009808
      %v2098 = vunpack.c.0.s8 %v2097
      %v2099 = vlaneseq
      %v2100 = vshrl.u32 %v2099, 7
      %v2101 = vsub.s32 %v2098, %v2100
      %v2102 = vrot.slane %v2088, %v2101
      %v2103 = vcombine.low %v1898, %v1902
      %v2104 = vcombine.high %v1898, %v1902
      %v2106 = vunpack.c.l.s4 1983009808
      %v2107 = vunpack.c.0.s8 %v2106
      %v2108 = vlaneseq
      %v2109 = vshrl.u32 %v2108, 7
      %v2110 = vsub.s32 %v2107, %v2109
      %v2111 = vrot.slane %v2103, %v2110
      %v2113 = vunpack.c.l.s4 1983009808
      %v2114 = vunpack.c.0.s8 %v2113
      %v2115 = vlaneseq
      %v2116 = vshrl.u32 %v2115, 7
      %v2117 = vsub.s32 %v2114, %v2116
      %v2118 = vrot.slane %v2104, %v2117
      %v2119 = vcombine.low %v2063, %v2079
      %v2120 = vcombine.high %v2063, %v2079
      %v2122 = vunpack.c.l.s4 1934713408
      %v2123 = vunpack.c.0.s8 %v2122
      %v2124 = vlaneseq
      %v2125 = vshrl.u32 %v2124, 7
      %v2126 = vsub.s32 %v2123, %v2125
      %v2127 = vrot.slane %v2119, %v2126
      %v2129 = vunpack.c.l.s4 1934713408
      %v2130 = vunpack.c.0.s8 %v2129
      %v2131 = vlaneseq
      %v2132 = vshrl.u32 %v2131, 7
      %v2133 = vsub.s32 %v2130, %v2132
      %v2134 = vrot.slane %v2120, %v2133
      %v2135 = vcombine.low %v2070, %v2086
      %v2136 = vcombine.high %v2070, %v2086
      %v2138 = vunpack.c.l.s4 1934713408
      %v2139 = vunpack.c.0.s8 %v2138
      %v2140 = vlaneseq
      %v2141 = vshrl.u32 %v2140, 7
      %v2142 = vsub.s32 %v2139, %v2141
      %v2143 = vrot.slane %v2135, %v2142
      %v2145 = vunpack.c.l.s4 1934713408
      %v2146 = vunpack.c.0.s8 %v2145
      %v2147 = vlaneseq
      %v2148 = vshrl.u32 %v2147, 7
      %v2149 = vsub.s32 %v2146, %v2148
      %v2150 = vrot.slane %v2136, %v2149
      %v2151 = vcombine.low %v2095, %v2111
      %v2152 = vcombine.high %v2095, %v2111
      %v2154 = vunpack.c.l.s4 1934713408
      %v2155 = vunpack.c.0.s8 %v2154
      %v2156 = vlaneseq
      %v2157 = vshrl.u32 %v2156, 7
      %v2158 = vsub.s32 %v2155, %v2157
      %v2159 = vrot.slane %v2151, %v2158
      %v2161 = vunpack.c.l.s4 1934713408
      %v2162 = vunpack.c.0.s8 %v2161
      %v2163 = vlaneseq
      %v2164 = vshrl.u32 %v2163, 7
      %v2165 = vsub.s32 %v2162, %v2164
      %v2166 = vrot.slane %v2152, %v2165
      %v2167 = vcombine.low %v2102, %v2118
      %v2168 = vcombine.high %v2102, %v2118
      %v2170 = vunpack.c.l.s4 1934713408
      %v2171 = vunpack.c.0.s8 %v2170
      %v2172 = vlaneseq
      %v2173 = vshrl.u32 %v2172, 7
      %v2174 = vsub.s32 %v2171, %v2173
      %v2175 = vrot.slane %v2167, %v2174
      %v2177 = vunpack.c.l.s4 1934713408
      %v2178 = vunpack.c.0.s8 %v2177
      %v2179 = vlaneseq
      %v2180 = vshrl.u32 %v2179, 7
      %v2181 = vsub.s32 %v2178, %v2180
      %v2182 = vrot.slane %v2168, %v2181
      %v2183 = vcombine.low %v2127, %v2159
      %v2184 = vcombine.high %v2127, %v2159
      %v2185 = vcombine.low %v2134, %v2166
      %v2186 = vcombine.high %v2134, %v2166
      %v2187 = vcombine.low %v2143, %v2175
      %v2188 = vcombine.high %v2143, %v2175
      %v2189 = vcombine.low %v2150, %v2182
      %v2190 = vcombine.high %v2150, %v2182
      %2193 = vrot.lane.b32.xlu0 %v2048, 8
      %v2194 = vpop.permute.xlu0 %2193
      %2195 = vrot.lane.b32.xlu0 %v2184, 8
      %v2196 = vpop.permute.xlu0 %2195
      %2201 = vrot.lane.b32.xlu0 %v2049, 16
      %v2202 = vpop.permute.xlu0 %2201
      %2203 = vrot.lane.b32.xlu0 %v2185, 16
      %v2204 = vpop.permute.xlu0 %2203
      %2209 = vrot.lane.b32.xlu0 %v2050, 24
      %v2210 = vpop.permute.xlu0 %2209
      %2211 = vrot.lane.b32.xlu0 %v2186, 24
      %v2212 = vpop.permute.xlu0 %2211
      %2217 = vrot.lane.b32.xlu0 %v2051, 32
      %v2218 = vpop.permute.xlu0 %2217
      %2219 = vrot.lane.b32.xlu0 %v2187, 32
      %v2220 = vpop.permute.xlu0 %2219
      %2225 = vrot.lane.b32.xlu0 %v2052, 40
      %v2226 = vpop.permute.xlu0 %2225
      %2227 = vrot.lane.b32.xlu0 %v2188, 40
      %v2228 = vpop.permute.xlu0 %2227
      %2233 = vrot.lane.b32.xlu0 %v2053, 48
      %v2234 = vpop.permute.xlu0 %2233
      %2235 = vrot.lane.b32.xlu0 %v2189, 48
      %v2236 = vpop.permute.xlu0 %2235
      %2241 = vrot.lane.b32.xlu0 %v2054, 56
      %v2242 = vpop.permute.xlu0 %2241
      %2243 = vrot.lane.b32.xlu0 %v2190, 56
      %v2244 = vpop.permute.xlu0 %2243
      %v2247 = vsel %vm586, %v2047, %v2194
      %v2248 = vsel %vm586, %v2183, %v2196
      %v2249 = vsel %vm589, %v2247, %v2202
      %v2250 = vsel %vm589, %v2248, %v2204
      %v2251 = vsel %vm592, %v2249, %v2210
      %v2252 = vsel %vm592, %v2250, %v2212
      %v2253 = vsel %vm595, %v2251, %v2218
      %v2254 = vsel %vm595, %v2252, %v2220
      %v2255 = vsel %vm598, %v2253, %v2226
      %v2256 = vsel %vm598, %v2254, %v2228
      %v2257 = vsel %vm601, %v2255, %v2234
      %v2258 = vsel %vm601, %v2256, %v2236
      %v2259 = vsel %vm604, %v2257, %v2242
      %v2260 = vsel %vm604, %v2258, %v2244
      %2261 = vxpose.xlu0.b32.start [1/16] %v2259, 128
      %2262 = vxpose.xlu0.b32.cont [2/16] %v2260, 128
      %2263 = vxpose.xlu0.b32.cont [3/16] 0.0, 128
      %2264 = vxpose.xlu0.b32.cont [4/16] 0.0, 128
      %2265 = vxpose.xlu0.b32.cont [5/16] 0.0, 128
      %2266 = vxpose.xlu0.b32.cont [6/16] 0.0, 128
      %2267 = vxpose.xlu0.b32.cont [7/16] 0.0, 128
      %2268 = vxpose.xlu0.b32.cont [8/16] 0.0, 128
      %2269 = vxpose.xlu0.b32.cont [9/16] 0.0, 128
      %2270 = vxpose.xlu0.b32.cont [10/16] 0.0, 128
      %2271 = vxpose.xlu0.b32.cont [11/16] 0.0, 128
      %2272 = vxpose.xlu0.b32.cont [12/16] 0.0, 128
      %2273 = vxpose.xlu0.b32.cont [13/16] 0.0, 128
      %2274 = vxpose.xlu0.b32.cont [14/16] 0.0, 128
      %2275 = vxpose.xlu0.b32.cont [15/16] 0.0, 128
      %2276 = vxpose.xlu0.b32.end [16/16] 0.0, 128
      %v2277 = vpop.trf.xlu0
      %v2278 = vpop.trf.xlu0
      %v2279 = vpop.trf.xlu0
      %v2280 = vpop.trf.xlu0
      %v2281 = vpop.trf.xlu0
      %v2282 = vpop.trf.xlu0
      %v2283 = vpop.trf.xlu0
      %v2284 = vpop.trf.xlu0
      %v2285 = vpop.trf.xlu0
      %v2286 = vpop.trf.xlu0
      %v2287 = vpop.trf.xlu0
      %v2288 = vpop.trf.xlu0
      %v2289 = vpop.trf.xlu0
      %v2290 = vpop.trf.xlu0
      %v2291 = vpop.trf.xlu0
      %v2292 = vpop.trf.xlu0
      %v2293 = vpack.c.bf16 %v2277, %v2277
      %v2294 = vpack.c.bf16 %v2278, %v2278
      %v2295 = vpack.c.bf16 %v2279, %v2279
      %v2296 = vpack.c.bf16 %v2280, %v2280
      %v2297 = vpack.c.bf16 %v2281, %v2281
      %v2298 = vpack.c.bf16 %v2282, %v2282
      %v2299 = vpack.c.bf16 %v2283, %v2283
      %v2300 = vpack.c.bf16 %v2284, %v2284
      %2301 = vst.msk [vmem:[%s206 + $0xc] sm:$0xf] %vm647, %v2293
      %2302 = vst.msk [vmem:[%s206 + $0x1c] sm:$0xf] %vm647, %v2294
      %2303 = vst.msk [vmem:[%s206 + $0x2c] sm:$0xf] %vm647, %v2295
      %2304 = vst.msk [vmem:[%s206 + $0x3c] sm:$0xf] %vm647, %v2296
      %2305 = vst.msk [vmem:[%s206 + $0x4c] sm:$0xf] %vm647, %v2297
      %2306 = vst.msk [vmem:[%s206 + $0x5c] sm:$0xf] %vm647, %v2298
      %2307 = vst.msk [vmem:[%s206 + $0x6c] sm:$0xf] %vm647, %v2299
      %2308 = vst.msk [vmem:[%s206 + $0x7c] sm:$0xf] %vm647, %v2300
      %s2309 = smul.u32 8, %s18
      %p2310 = scmp.lt.s32.totalorder %s17, 1
      %s2311 = scalar_select %p2310, %s17, 1
      %p2312 = scmp.lt.s32.totalorder %s2309, 31
      %s2313 = scalar_select %p2312, %s2309, 31
      %s2314 = smul.addr %s2313, 4
      %s2315 = smul.addr %s2311, 128
      %s2316 = sadd.s32 %s2314, %s2315
      %s2317 = smul.addr %s2316, 4
      %s2318 = scalar_lea.vmem %s2, %s2317
      // Predicated region
      $region29: #{tpu_custom_call.1} parent=27 // pred_check
        %p2319 = pneg %p101
      $region30: #{tpu_custom_call.1} parent=27 // pred_check_branch
        %2321 = sbr.rel (%p2319) target = $region32
      $region31: #{tpu_custom_call.1} parent=27 // pred_region
        %s2322 = smul.u32 8, %s18
      $region32: #{tpu_custom_call.1} parent=27 // pred_fallthru
        _
    $region28: #{tpu_custom_call.1} parent=5 // pred_fallthru
      _
    %p2323 = scmp.le.s32.totalorder 2, %s8
    // Predicated region
    $region33: #{tpu_custom_call.1} parent=5 // pred_check
      %p2324 = pneg %p2323
    $region34: #{tpu_custom_call.1} parent=5 // pred_check_branch
      %2326 = sbr.rel (%p2324) target = $region36
    $region35: #{tpu_custom_call.1} parent=5 // pred_region
      %s2327 = ssub.s32 %s8, 2
      // Predicated region
      $region37: #{tpu_custom_call.1} parent=35 // pred_check
        %p2328 = pneg %p107
      $region38: #{tpu_custom_call.1} parent=35 // pred_check_branch
        %2330 = sbr.rel (%p2328) target = $region40
      $region39: #{tpu_custom_call.1} parent=35 // pred_region
        %s2331 = smul.u32 8, %s20
        %p2332 = scmp.lt.s32.totalorder %s19, 1
        %s2333 = scalar_select %p2332, %s19, 1
        %p2334 = scmp.lt.s32.totalorder %s2331, 31
        %s2335 = scalar_select %p2334, %s2331, 31
        %s2336 = smul.addr %s2335, 4
        %s2337 = smul.addr %s2333, 128
        %s2338 = sadd.s32 %s2336, %s2337
        %s2339 = smul.addr %s2338, 4
        %s2340 = scalar_lea.vmem %s2, %s2339
      $region40: #{tpu_custom_call.1} parent=35 // pred_fallthru
        _
    $region36: #{tpu_custom_call.1} parent=5 // pred_fallthru
      _
  $region6: #{tpu_custom_call.1} parent=0 // loop_footer
    %s12 = sadd.s32 1, %s8
  $region7: #{tpu_custom_call.1} parent=0 // loop_footer_branch
    %7 = sbr.rel target = $region3
  $region8: #{tpu_custom_call.1} parent=0 // loop_exit
    _

</llo_original>
